<compile_context>
chip_gen: v5e
topology: v5e:2x2
jax: 0.10.0
libtpu: 0.0.40
codegen_flags: <defaults>
</compile_context>

<pallas_src>
import functools

import jax
import jax.numpy as jnp
from jax import lax
from jax.experimental import pallas as pl
from jax.experimental.pallas import tpu as pltpu

COMMITMENT_COST = 0.25
EPSILON = 1e-05

# TODO(synk): training-time EMA buffer updates (_ema_cluster_size, _ema_w,
# embedding re-assignment) mutate module state but never change forward()'s
# returned values; not implemented (eval-mode semantics).
# TODO(synk): the straight-through estimator (inputs + (q - inputs).detach())
# only changes the backward pass; its forward value equals q, so the kernel
# stores q directly.  Training would need a custom_vjp.


def _round_up(a, b):
    return (a + b - 1) // b * b


def _vmem_limit_bytes():
    # Generation-aware VMEM budget: ~3/4 of physical, capped at 100 MiB
    # (-> ~96 MiB on v5e/v6e's 128 MiB, ~48 MiB on v7x's 64 MiB per core).
    try:
        cap = pltpu.get_tpu_info().vmem_capacity_bytes
    except Exception:
        return 48 * 1024 * 1024
    return min((int(cap) * 3) // 4, 100 * 1024 * 1024)


def _vq_kernel(x_ref, e_ref, e2_ref,              # inputs
               q_ref, idx_ref, sq_ref, cnt_ref,   # outputs
               *, hw_valid, tn, use_bf16):
    j = pl.program_id(1)

    # Per-batch accumulators live in the resident output blocks.
    @pl.when(j == 0)
    def _init():
        sq_ref[...] = jnp.zeros_like(sq_ref)
        cnt_ref[...] = jnp.zeros_like(cnt_ref)

    x = x_ref[...]                                    # [D, TN]  f32
    e = e_ref[...]                                    # [Kp, D]  f32 (zero-padded rows)
    kp = e.shape[0]

    # argmin_k ||x - e_k||^2 == argmin_k (||e_k||^2 - 2 e_k.x): the ||x||^2
    # term is column-constant and dropped.  Padded codebook rows carry
    # e2 = 1e30 so they can never win.  Distances are computed transposed
    # ([Kp, TN]) so the argmin reduces over sublanes and the resulting index
    # row is already lane-dense.
    if use_bf16:
        xet = lax.dot_general(e.astype(jnp.bfloat16), x.astype(jnp.bfloat16),
                              (((1,), (0,)), ((), ())),
                              preferred_element_type=jnp.float32)   # [Kp, TN]
    else:
        xet = lax.dot_general(e, x, (((1,), (0,)), ((), ())),
                              preferred_element_type=jnp.float32)   # [Kp, TN]
    dists = e2_ref[...] - 2.0 * xet                                  # [Kp, TN]

    min_d = jnp.min(dists, axis=0, keepdims=True)                    # [1, TN]
    row = lax.broadcasted_iota(jnp.int32, dists.shape, 0)            # [Kp, TN]
    idx = jnp.min(jnp.where(dists == min_d, row, kp),
                  axis=0, keepdims=True)                             # [1, TN] first occurrence
    idx_ref[...] = idx

    # One-hot stays a VMEM temporary; quantized columns via MXU pick, already
    # in NCHW orientation ([D, TN]).
    enc = (row == idx).astype(jnp.float32)                           # [Kp, TN]
    q = lax.dot_general(e, enc, (((0,), (0,)), ((), ())),
                        preferred_element_type=jnp.float32)          # [D, TN]
    q_ref[...] = q          # forward value of inputs + (q - inputs).detach()

    # Mask columns that fall in the padded tail of the last HW tile.
    col = j * tn + lax.broadcasted_iota(jnp.int32, (1, tn), 1)       # [1, TN]
    valid = col < hw_valid                                           # [1, TN] bool

    diff = jnp.where(valid, q - x, 0.0)                              # [D, TN]
    sq = jnp.sum(jnp.sum(diff * diff, axis=0, keepdims=True),
                 axis=1, keepdims=True)                              # [1, 1]
    sq_ref[...] += sq
    cnt_ref[...] += jnp.sum(jnp.where(valid, enc, 0.0),
                            axis=1, keepdims=True)                   # [Kp, 1]


def vector_quantizer_ema_forward(x_nchw, embedding_w, *,
                                 block_cols=2048, use_bf16_distances=False):
    """x_nchw: [B, D, H, W] f32, embedding_w: [K, D] f32.

    Returns (loss, quantized_nchw, perplexity, encodings), matching the
    PyTorch module's forward (eval mode)."""
    b, d, h, w = x_nchw.shape
    k, d2 = embedding_w.shape
    assert d == d2, "channel dim must equal embedding_dim"
    hw = h * w
    n = b * hw

    # Keep the NCHW layout: [B, D, H, W] -> [B, D, HW] is metadata-only.
    x = x_nchw.reshape(b, d, hw).astype(jnp.float32)

    # Lane tile over HW: full width if it fits, else a multiple of 128.
    if hw <= block_cols:
        tn = hw
    else:
        tn = max(128, (block_cols // 128) * 128)
    grid_j = (hw + tn - 1) // tn

    # Sublane-padded codebook; ||e||^2 precomputed, padded rows masked with
    # 1e30 so they never win the argmin.
    k_pad = _round_up(k, 8)
    e = embedding_w.astype(jnp.float32)
    if k_pad != k:
        e = jnp.pad(e, ((0, k_pad - k), (0, 0)))
    e2 = jnp.sum(e * e, axis=1)
    e2 = jnp.where(jnp.arange(k_pad) < k, e2, 1e30).reshape(k_pad, 1)

    kernel = functools.partial(_vq_kernel, hw_valid=hw, tn=tn,
                               use_bf16=use_bf16_distances)

    q, idx, sq_part, cnt_part = pl.pallas_call(
        kernel,
        out_shape=(
            jax.ShapeDtypeStruct((b, d, hw), jnp.float32),      # quantized (NCHW)
            jax.ShapeDtypeStruct((b, 1, hw), jnp.int32),        # code indices
            jax.ShapeDtypeStruct((b, 1, 1), jnp.float32),       # per-batch sum sq err
            jax.ShapeDtypeStruct((b, k_pad, 1), jnp.float32),   # per-batch code counts
        ),
        grid_spec=pltpu.PrefetchScalarGridSpec(
            num_scalar_prefetch=0,
            grid=(b, grid_j),
            in_specs=[
                pl.BlockSpec((None, d, tn), lambda bi, j: (bi, 0, j)),   # x tile
                # NOTE: codebook blocks are grid-constant (resident).  For very
                # large codebooks, pipeline_mode=pl.Buffered(1) would drop the
                # pointless second buffer (negligible at K~100).
                pl.BlockSpec((k_pad, d), lambda bi, j: (0, 0)),          # codebook
                pl.BlockSpec((k_pad, 1), lambda bi, j: (0, 0)),          # ||e||^2
            ],
            out_specs=(
                pl.BlockSpec((None, d, tn), lambda bi, j: (bi, 0, j)),
                pl.BlockSpec((None, 1, tn), lambda bi, j: (bi, 0, j)),
                pl.BlockSpec((None, 1, 1), lambda bi, j: (bi, 0, 0)),
                pl.BlockSpec((None, k_pad, 1), lambda bi, j: (bi, 0, 0)),
            ),
        ),
        compiler_params=pltpu.CompilerParams(
            # Batch axis is independent -> "parallel" (splits across the two
            # TensorCores on v7x); the HW axis carries per-batch accumulators.
            dimension_semantics=("parallel", "arbitrary"),
            vmem_limit_bytes=_vmem_limit_bytes(),
        ),
    )(x, e, e2)

    # Tiny final reductions over [B]-sized partials (done in the wrapper so
    # the batch grid axis can stay "parallel").
    loss = (COMMITMENT_COST / float(n * d)) * jnp.sum(sq_part)
    avg_probs = jnp.sum(cnt_part[:, :k, 0], axis=0) / float(n)           # [K]
    perplexity = jnp.exp(-jnp.sum(avg_probs * jnp.log(avg_probs + 1e-10)))

    quantized_nchw = q.reshape(b, d, h, w)
    indices = idx.reshape(-1)                          # [N] in (b, h, w) order
    # TODO(synk): callers that only need indices should skip this one-hot; it
    # is materialized solely to match the module's return signature.
    encodings = jax.nn.one_hot(indices, k, dtype=jnp.float32)
    return loss, quantized_nchw, perplexity, encodings


def _reference(x_nchw, embedding_w):
    """Pure-JAX reference mirroring the torch forward (eval mode)."""
    b, d, h, w = x_nchw.shape
    x = jnp.transpose(x_nchw, (0, 2, 3, 1))
    flat = x.reshape(-1, d)
    dist = (jnp.sum(flat ** 2, axis=1, keepdims=True)
            + jnp.sum(embedding_w ** 2, axis=1)
            - 2.0 * flat @ embedding_w.T)
    idx = jnp.argmin(dist, axis=1)
    enc = jax.nn.one_hot(idx, embedding_w.shape[0], dtype=jnp.float32)
    q = (enc @ embedding_w).reshape(x.shape)
    loss = COMMITMENT_COST * jnp.mean((q - x) ** 2)
    avg = jnp.mean(enc, axis=0)
    perp = jnp.exp(-jnp.sum(avg * jnp.log(avg + 1e-10)))
    q_out = jnp.transpose(x + (q - x), (0, 3, 1, 2))
    return loss, q_out, perp, enc


if __name__ == "__main__":
    # small shapes consistent with the module: channels == embedding_dim
    batch, embedding_dim, spatial = 2, 64, 16
    num_embeddings = 100

    key = jax.random.PRNGKey(0)
    k_x, k_emb = jax.random.split(key)
    x = jax.random.normal(k_x, (batch, embedding_dim, spatial, spatial),
                          dtype=jnp.float32)
    # deterministic init of the codebook (embedding.weight.data.normal_())
    embedding_w = jax.random.normal(k_emb, (num_embeddings, embedding_dim),
                                    dtype=jnp.float32)

    loss, quantized, perplexity, encodings = jax.block_until_ready(
        vector_quantizer_ema_forward(x, embedding_w))

    # sanity check against pure-JAX reference
    r_loss, r_q, r_perp, r_enc = _reference(x, embedding_w)
    assert quantized.shape == x.shape
    assert encodings.shape == (batch * spatial * spatial, num_embeddings)
    assert jnp.allclose(loss, r_loss, rtol=1e-3, atol=1e-3)
    assert jnp.allclose(perplexity, r_perp, rtol=1e-3, atol=1e-3)
    assert jnp.allclose(quantized, r_q, rtol=1e-3, atol=1e-3)
    assert jnp.allclose(encodings, r_enc)

    print("KERNEL_OK")
</pallas_src>

<mosaic_0001>
module attributes {stable_mosaic.version = 11 : i64} {
  func.func @_vq_kernel(%arg0: i32, %arg1: i32, %arg2: memref<1x64x256xf32, #tpu.memory_space<vmem>>, %arg3: memref<104x64xf32, #tpu.memory_space<vmem>>, %arg4: memref<104x1xf32, #tpu.memory_space<vmem>>, %arg5: memref<1x64x256xf32, #tpu.memory_space<vmem>>, %arg6: memref<1x1x256xi32, #tpu.memory_space<vmem>>, %arg7: memref<1x1x1xf32, #tpu.memory_space<vmem>>, %arg8: memref<1x104x1xf32, #tpu.memory_space<vmem>>) attributes {dimension_semantics = [#tpu.dimension_semantics<parallel>, #tpu.dimension_semantics<arbitrary>], iteration_bounds = array<i64: 2, 1>, scalar_prefetch = 0 : i64, scratch_operands = 0 : i64, tpu.core_type = #tpu.core_type<tc>, window_params = [{transform_indices = @transform_0, window_bounds = array<i64: 1, 64, 256>}, {pipeline_mode = #tpu.pipeline_mode<synchronous>, transform_indices = @transform_1, window_bounds = array<i64: 104, 64>}, {pipeline_mode = #tpu.pipeline_mode<synchronous>, transform_indices = @transform_2, window_bounds = array<i64: 104, 1>}, {transform_indices = @transform_3, window_bounds = array<i64: 1, 64, 256>}, {transform_indices = @transform_4, window_bounds = array<i64: 1, 1, 256>}, {transform_indices = @transform_5, window_bounds = array<i64: 1, 1, 1>}, {transform_indices = @transform_6, window_bounds = array<i64: 1, 104, 1>}]} {
    %c0_i32 = arith.constant 0 : i32
    %0 = arith.cmpi eq, %arg1, %c0_i32 : i32
    %1 = arith.extui %0 : i1 to i32
    %c0_i32_0 = arith.constant 0 : i32
    %2 = arith.cmpi ne, %1, %c0_i32_0 : i32
    scf.if %2 {
      %cst_35 = arith.constant 0.000000e+00 : f32
      %66 = vector.broadcast %cst_35 : f32 to vector<1x1xf32>
      %c0_36 = arith.constant 0 : index
      %c0_37 = arith.constant 0 : index
      %c0_38 = arith.constant 0 : index
      %67 = vector.load %arg7[%c0_36, %c0_37, %c0_38] : memref<1x1x1xf32, #tpu.memory_space<vmem>>, vector<1x1x1xf32>
      %68 = vector.shape_cast %67 : vector<1x1x1xf32> to vector<1x1xf32>
      %69 = vector.shape_cast %66 : vector<1x1xf32> to vector<1x1x1xf32>
      tpu.vector_store %arg7[%c0_36, %c0_37, %c0_38], %69 {strides = array<i32>} : memref<1x1x1xf32, #tpu.memory_space<vmem>>, vector<1x1x1xf32>,
      %cst_39 = arith.constant 0.000000e+00 : f32
      %70 = vector.broadcast %cst_39 : f32 to vector<104x1xf32>
      %c0_40 = arith.constant 0 : index
      %c0_41 = arith.constant 0 : index
      %c0_42 = arith.constant 0 : index
      %71 = vector.load %arg8[%c0_40, %c0_41, %c0_42] : memref<1x104x1xf32, #tpu.memory_space<vmem>>, vector<1x104x1xf32>
      %72 = vector.shape_cast %71 : vector<1x104x1xf32> to vector<104x1xf32>
      %73 = vector.shape_cast %70 : vector<104x1xf32> to vector<1x104x1xf32>
      tpu.vector_store %arg8[%c0_40, %c0_41, %c0_42], %73 {strides = array<i32>} : memref<1x104x1xf32, #tpu.memory_space<vmem>>, vector<1x104x1xf32>,
    } else {
    }
    %c0 = arith.constant 0 : index
    %c0_1 = arith.constant 0 : index
    %c0_2 = arith.constant 0 : index
    %3 = vector.load %arg2[%c0, %c0_1, %c0_2] : memref<1x64x256xf32, #tpu.memory_space<vmem>>, vector<1x64x256xf32>
    %4 = vector.shape_cast %3 : vector<1x64x256xf32> to vector<64x256xf32>
    %c0_3 = arith.constant 0 : index
    %c0_4 = arith.constant 0 : index
    %5 = vector.load %arg3[%c0_3, %c0_4] : memref<104x64xf32, #tpu.memory_space<vmem>>, vector<104x64xf32>
    %cst = arith.constant dense<0.000000e+00> : vector<104x256xf32>
    %6 = tpu.matmul %5, %4, %cst {dimension_numbers = #tpu.dot_dimension_numbers<[1], [0], [0], [1], [0, 0, 1, 1], [], []>} : vector<104x64xf32>, vector<64x256xf32>, vector<104x256xf32> -> vector<104x256xf32>
    %c0_5 = arith.constant 0 : index
    %c0_6 = arith.constant 0 : index
    %7 = vector.load %arg4[%c0_5, %c0_6] : memref<104x1xf32, #tpu.memory_space<vmem>>, vector<104x1xf32>
    %cst_7 = arith.constant 2.000000e+00 : f32
    %8 = vector.broadcast %cst_7 : f32 to vector<104x256xf32>
    %9 = arith.mulf %8, %6 : vector<104x256xf32>
    %10 = vector.broadcast %7 : vector<104x1xf32> to vector<104x256xf32>
    %11 = arith.subf %10, %9 : vector<104x256xf32>
    %cst_8 = arith.constant dense<0x7F800000> : vector<256xf32>
    %12 = vector.multi_reduction <minimumf>, %11, %cst_8 [0] : vector<104x256xf32> to vector<256xf32>
    %13 = vector.shape_cast %12 : vector<256xf32> to vector<1x256xf32>
    %14 = tpu.iota {dimensions = array<i32: 0>} : vector<104x256xi32>
    %15 = vector.broadcast %13 : vector<1x256xf32> to vector<104x256xf32>
    %16 = arith.cmpf oeq, %11, %15 : vector<104x256xf32>
    %c104_i32 = arith.constant 104 : i32
    %17 = vector.broadcast %c104_i32 : i32 to vector<104x256xi32>
    %18 = arith.select %16, %14, %17 : vector<104x256xi1>, vector<104x256xi32>
    %cst_9 = arith.constant dense<2147483647> : vector<256xi32>
    %19 = vector.multi_reduction <minsi>, %18, %cst_9 [0] : vector<104x256xi32> to vector<256xi32>
    %20 = vector.shape_cast %19 : vector<256xi32> to vector<1x256xi32>
    %c0_10 = arith.constant 0 : index
    %c0_11 = arith.constant 0 : index
    %c0_12 = arith.constant 0 : index
    %21 = vector.load %arg6[%c0_10, %c0_11, %c0_12] : memref<1x1x256xi32, #tpu.memory_space<vmem>>, vector<1x1x256xi32>
    %22 = vector.shape_cast %21 : vector<1x1x256xi32> to vector<1x256xi32>
    %23 = vector.shape_cast %20 : vector<1x256xi32> to vector<1x1x256xi32>
    tpu.vector_store %arg6[%c0_10, %c0_11, %c0_12], %23 {strides = array<i32>} : memref<1x1x256xi32, #tpu.memory_space<vmem>>, vector<1x1x256xi32>,
    %24 = vector.broadcast %20 : vector<1x256xi32> to vector<104x256xi32>
    %25 = arith.cmpi eq, %14, %24 : vector<104x256xi32>
    %26 = arith.extui %25 : vector<104x256xi1> to vector<104x256xi32>
    %27 = arith.sitofp %26 : vector<104x256xi32> to vector<104x256xf32>
    %cst_13 = arith.constant dense<0.000000e+00> : vector<64x256xf32>
    %28 = tpu.matmul %5, %27, %cst_13 {dimension_numbers = #tpu.dot_dimension_numbers<[0], [0], [1], [1], [0, 1, 1, 1], [], []>} : vector<104x64xf32>, vector<104x256xf32>, vector<64x256xf32> -> vector<64x256xf32>
    %c0_14 = arith.constant 0 : index
    %c0_15 = arith.constant 0 : index
    %c0_16 = arith.constant 0 : index
    %29 = vector.load %arg5[%c0_14, %c0_15, %c0_16] : memref<1x64x256xf32, #tpu.memory_space<vmem>>, vector<1x64x256xf32>
    %30 = vector.shape_cast %29 : vector<1x64x256xf32> to vector<64x256xf32>
    %31 = vector.shape_cast %28 : vector<64x256xf32> to vector<1x64x256xf32>
    tpu.vector_store %arg5[%c0_14, %c0_15, %c0_16], %31 {strides = array<i32>} : memref<1x64x256xf32, #tpu.memory_space<vmem>>, vector<1x64x256xf32>,
    %c256_i32 = arith.constant 256 : i32
    %32 = arith.muli %arg1, %c256_i32 : i32
    %33 = tpu.iota {dimensions = array<i32: 1>} : vector<1x256xi32>
    %34 = vector.broadcast %32 : i32 to vector<1x256xi32>
    %35 = arith.addi %34, %33 : vector<1x256xi32>
    %c256_i32_17 = arith.constant 256 : i32
    %36 = vector.broadcast %c256_i32_17 : i32 to vector<1x256xi32>
    %37 = arith.cmpi slt, %35, %36 : vector<1x256xi32>
    %38 = arith.subf %28, %4 : vector<64x256xf32>
    %cst_18 = arith.constant 0.000000e+00 : f32
    %39 = vector.shape_cast %37 : vector<1x256xi1> to vector<1x256xi1>
    %40 = vector.broadcast %39 : vector<1x256xi1> to vector<64x256xi1>
    %41 = vector.broadcast %cst_18 : f32 to vector<64x256xf32>
    %42 = arith.select %40, %38, %41 : vector<64x256xi1>, vector<64x256xf32>
    %43 = arith.mulf %42, %42 : vector<64x256xf32>
    %cst_19 = arith.constant dense<0.000000e+00> : vector<256xf32>
    %44 = vector.multi_reduction <add>, %43, %cst_19 [0] : vector<64x256xf32> to vector<256xf32>
    %45 = vector.shape_cast %44 : vector<256xf32> to vector<1x256xf32>
    %cst_20 = arith.constant dense<0.000000e+00> : vector<1xf32>
    %46 = vector.multi_reduction <add>, %45, %cst_20 [1] : vector<1x256xf32> to vector<1xf32>
    %47 = vector.shape_cast %46 : vector<1xf32> to vector<1x1xf32>
    %c0_21 = arith.constant 0 : index
    %c0_22 = arith.constant 0 : index
    %c0_23 = arith.constant 0 : index
    %48 = vector.load %arg7[%c0_21, %c0_22, %c0_23] : memref<1x1x1xf32, #tpu.memory_space<vmem>>, vector<1x1x1xf32>
    %49 = vector.shape_cast %48 : vector<1x1x1xf32> to vector<1x1xf32>
    %50 = arith.addf %49, %47 : vector<1x1xf32>
    %c0_24 = arith.constant 0 : index
    %c0_25 = arith.constant 0 : index
    %c0_26 = arith.constant 0 : index
    %51 = vector.load %arg7[%c0_24, %c0_25, %c0_26] : memref<1x1x1xf32, #tpu.memory_space<vmem>>, vector<1x1x1xf32>
    %52 = vector.shape_cast %51 : vector<1x1x1xf32> to vector<1x1xf32>
    %53 = vector.shape_cast %50 : vector<1x1xf32> to vector<1x1x1xf32>
    tpu.vector_store %arg7[%c0_24, %c0_25, %c0_26], %53 {strides = array<i32>} : memref<1x1x1xf32, #tpu.memory_space<vmem>>, vector<1x1x1xf32>,
    %c0_27 = arith.constant 0 : index
    %c0_28 = arith.constant 0 : index
    %c0_29 = arith.constant 0 : index
    %54 = vector.load %arg8[%c0_27, %c0_28, %c0_29] : memref<1x104x1xf32, #tpu.memory_space<vmem>>, vector<1x104x1xf32>
    %55 = vector.shape_cast %54 : vector<1x104x1xf32> to vector<104x1xf32>
    %cst_30 = arith.constant 0.000000e+00 : f32
    %56 = vector.shape_cast %37 : vector<1x256xi1> to vector<1x256xi1>
    %57 = vector.broadcast %56 : vector<1x256xi1> to vector<104x256xi1>
    %58 = vector.broadcast %cst_30 : f32 to vector<104x256xf32>
    %59 = arith.select %57, %27, %58 : vector<104x256xi1>, vector<104x256xf32>
    %cst_31 = arith.constant dense<0.000000e+00> : vector<104xf32>
    %60 = vector.multi_reduction <add>, %59, %cst_31 [1] : vector<104x256xf32> to vector<104xf32>
    %61 = vector.shape_cast %60 : vector<104xf32> to vector<104x1xf32>
    %62 = arith.addf %55, %61 : vector<104x1xf32>
    %c0_32 = arith.constant 0 : index
    %c0_33 = arith.constant 0 : index
    %c0_34 = arith.constant 0 : index
    %63 = vector.load %arg8[%c0_32, %c0_33, %c0_34] : memref<1x104x1xf32, #tpu.memory_space<vmem>>, vector<1x104x1xf32>
    %64 = vector.shape_cast %63 : vector<1x104x1xf32> to vector<104x1xf32>
    %65 = vector.shape_cast %62 : vector<104x1xf32> to vector<1x104x1xf32>
    tpu.vector_store %arg8[%c0_32, %c0_33, %c0_34], %65 {strides = array<i32>} : memref<1x104x1xf32, #tpu.memory_space<vmem>>, vector<1x104x1xf32>,
    return
  }
  func.func @transform_0(%arg0: i32, %arg1: i32) -> (i32, i32, i32) {
    %c0_i32 = arith.constant 0 : i32
    %c0_i32_0 = arith.constant 0 : i32
    return %arg0, %c0_i32, %arg1 : i32, i32, i32
  }
  func.func @transform_1(%arg0: i32, %arg1: i32) -> (i32, i32) {
    %c0_i32 = arith.constant 0 : i32
    %c0_i32_0 = arith.constant 0 : i32
    %c0_i32_1 = arith.constant 0 : i32
    return %c0_i32, %c0_i32_0 : i32, i32
  }
  func.func @transform_2(%arg0: i32, %arg1: i32) -> (i32, i32) {
    %c0_i32 = arith.constant 0 : i32
    %c0_i32_0 = arith.constant 0 : i32
    %c0_i32_1 = arith.constant 0 : i32
    return %c0_i32, %c0_i32_0 : i32, i32
  }
  func.func @transform_3(%arg0: i32, %arg1: i32) -> (i32, i32, i32) {
    %c0_i32 = arith.constant 0 : i32
    %c0_i32_0 = arith.constant 0 : i32
    return %arg0, %c0_i32, %arg1 : i32, i32, i32
  }
  func.func @transform_4(%arg0: i32, %arg1: i32) -> (i32, i32, i32) {
    %c0_i32 = arith.constant 0 : i32
    %c0_i32_0 = arith.constant 0 : i32
    return %arg0, %c0_i32, %arg1 : i32, i32, i32
  }
  func.func @transform_5(%arg0: i32, %arg1: i32) -> (i32, i32, i32) {
    %c0_i32 = arith.constant 0 : i32
    %c0_i32_0 = arith.constant 0 : i32
    %c0_i32_1 = arith.constant 0 : i32
    return %arg0, %c0_i32, %c0_i32_0 : i32, i32, i32
  }
  func.func @transform_6(%arg0: i32, %arg1: i32) -> (i32, i32, i32) {
    %c0_i32 = arith.constant 0 : i32
    %c0_i32_0 = arith.constant 0 : i32
    %c0_i32_1 = arith.constant 0 : i32
    return %arg0, %c0_i32, %c0_i32_0 : i32, i32, i32
  }
}

</mosaic_0001>

<llo_original>
// kernel: tpu_custom_call.1
$region0: #{tpu_custom_call.1}
  #allocation0 [shape = 'u32[]', space=smem, size = 0x4, offset = 0x4, fixed_abs, tag = 'smem constant byte address 0x4 - core index']
  #allocation1 [shape = 'u32[72,128]{1,0:T(1,128)}', space=vmem, size = 0x9000, scoped, tag = 'internal scratch']
  %s0 = inlined_call_operand.vmem [shape: f32[2,64,256], index: 0, kind: input, shape index: {}]
  %s1 = inlined_call_operand.vmem [shape: f32[104,64], index: 1, kind: input, shape index: {}]
  %s2 = inlined_call_operand.vmem [shape: f32[104,1], index: 2, kind: input, shape index: {}]
  %s3 = inlined_call_operand.hbm [shape: f32[2,64,256], index: 3, kind: output, shape index: {0}]
  %s4 = inlined_call_operand.hbm [shape: s32[2,1,256], index: 4, kind: output, shape index: {1}]
  %s5 = inlined_call_operand.vmem [shape: f32[2,1,1], index: 5, kind: output, shape index: {2}]
  %s6 = inlined_call_operand.vmem [shape: f32[2,104,1], index: 6, kind: output, shape index: {3}]
  %7 = xla_tuple %s3, %s4, %s5, %s6
  %s8 = sld [smem:[#allocation0]]
  $region73: #{tpu_custom_call.1} parent=0
    _
  %s10 = ssub.s32 1, %s8
  %s11 = scalar_select 0, %s10, %s8
  $region1: #{tpu_custom_call.1} parent=0
    #allocation2 [shape = 'u8[131072]{0}', space=vmem, size = 0x20000, scoped, tag = 'output window, operand 0']
    #allocation3 [shape = 's32[2]{0}', space=sflag, size = 0x8, scoped, tag = 'scoped memory for tpu_custom_call.1']
    #allocation4 [shape = 'u8[2048]{0}', space=vmem, size = 0x800, scoped, tag = 'output window, operand 1']
    #allocation5 [shape = 's32[2]{0}', space=sflag, size = 0x8, scoped, tag = 'scoped memory for tpu_custom_call.1']
    %12 = vsyncpa [#allocation3], 0
    %s13 = scalar_lea.sflag [#allocation3], 1
    %14 = vsyncpa %s13, 0
    %15 = vsyncpa [#allocation5], 0
    %s16 = scalar_lea.sflag [#allocation5], 1
    %17 = vsyncpa %s16, 0
    loop: start=0, step=1, limit=4
    $region2: #{tpu_custom_call.1} parent=1 // loop_pre_header
      _
    $region3: #{tpu_custom_call.1} parent=1 // loop_header
      %s19 = sphi 0, %s23
      %p20 = scmp.ge.s32.totalorder %s19, 4
      %s26 = sphi 0, %s38
      %s27 = sphi 0, %s34
      %s28 = sphi 0, %s26
      %s29 = sphi 0, %s27
      %s30 = sphi 0, %s28
      %s31 = sphi 0, %s29
      %s43 = sphi 0, %s45
      %s46 = sphi 0, %s43
      %s47 = sphi 0, %s46
      %s63 = sphi 0, %s47
      %s67 = sphi 0, %s67
      %s69 = sphi 0, %s67
      %s70 = sphi 0, %s69
      %s84 = sphi 0, %s70
      %s88 = sphi 0, %s88
      %s90 = sphi 0, %s88
      %s91 = sphi 0, %s90
      %s105 = sphi 0, %s91
      %s113 = sphi 0, %s115
      %s116 = sphi 0, %s113
      %s117 = sphi 0, %s116
      %s133 = sphi 0, %s117
      %s141 = sphi 0, %s143
      %s144 = sphi 0, %s141
      %s145 = sphi 0, %s144
      %s161 = sphi 0, %s145
      %s167 = sphi 0, %s169
      %s170 = sphi 0, %s167
      %s171 = sphi 0, %s170
      %s187 = sphi 0, %s171
      %s193 = sphi 0, %s195
      %s196 = sphi 0, %s193
      %s197 = sphi 0, %s196
      %s213 = sphi 0, %s197
    $region4: #{tpu_custom_call.1} parent=1 // loop_header_branch
      %22 = sbr.rel (%p20) target = $region8
    $region5: #{tpu_custom_call.1} parent=1 // loop_body
      %s24 = ssub.s32 %s19, 1
      %s25 = ssub.s32 %s19, 2
      %s32 = sadd.s32 1, %s27
      %p33 = scmp.ge.s32.totalorder %s32, 1
      %s34 = scalar_select %p33, 0, %s32
      %s35 = sadd.s32 1, %s26
      %s36 = scalar_select %p33, %s35, %s26
      %p37 = scmp.ge.s32.totalorder %s36, 2
      %s38 = scalar_select %p37, 0, %s36
      %s39 = ssub.s32 %s26, %s38
      %s40 = ssub.s32 %s27, %s34
      %s41 = sor.u32 %s39, %s40
      %p42 = scmp.eq.s32.totalorder %s41, 0
      %s44 = sadd.s32 %s43, 1
      %s45 = scalar_select %p42, %s43, %s44
      %p48 = pneg %p42
      %p49 = scmp.eq.s32.totalorder %s19, 1
      %p50 = por %p48, %p49
      %p51 = scmp.ne.s32.totalorder %s43, %s46
      %p52 = scmp.eq.s32.totalorder %s19, 0
      %p53 = por %p51, %p52
      %p54 = scmp.ne.s32.totalorder %s43, %s46
      %p55 = scmp.eq.s32.totalorder %s24, 1
      %p56 = por %p54, %p55
      %p57 = scmp.ne.s32.totalorder %s46, %s47
      %p58 = scmp.eq.s32.totalorder %s24, 0
      %p59 = por %p57, %p58
      %p60 = scmp.ne.s32.totalorder %s46, %s47
      %p61 = scmp.eq.s32.totalorder %s25, 1
      %p62 = por %p60, %p61
      %p64 = scmp.ne.s32.totalorder %s47, %s63
      %p65 = scmp.eq.s32.totalorder %s25, 0
      %p66 = por %p64, %p65
      %s68 = sadd.s32 %s67, 1
      %p71 = scmp.eq.s32.totalorder %s19, 1
      %p72 = scmp.ne.s32.totalorder %s67, %s69
      %p73 = scmp.eq.s32.totalorder %s19, 0
      %p74 = por %p72, %p73
      %p75 = scmp.ne.s32.totalorder %s67, %s69
      %p76 = scmp.eq.s32.totalorder %s24, 1
      %p77 = por %p75, %p76
      %p78 = scmp.ne.s32.totalorder %s69, %s70
      %p79 = scmp.eq.s32.totalorder %s24, 0
      %p80 = por %p78, %p79
      %p81 = scmp.ne.s32.totalorder %s69, %s70
      %p82 = scmp.eq.s32.totalorder %s25, 1
      %p83 = por %p81, %p82
      %p85 = scmp.ne.s32.totalorder %s70, %s84
      %p86 = scmp.eq.s32.totalorder %s25, 0
      %p87 = por %p85, %p86
      %s89 = sadd.s32 %s88, 1
      %p92 = scmp.eq.s32.totalorder %s19, 1
      %p93 = scmp.ne.s32.totalorder %s88, %s90
      %p94 = scmp.eq.s32.totalorder %s19, 0
      %p95 = por %p93, %p94
      %p96 = scmp.ne.s32.totalorder %s88, %s90
      %p97 = scmp.eq.s32.totalorder %s24, 1
      %p98 = por %p96, %p97
      %p99 = scmp.ne.s32.totalorder %s90, %s91
      %p100 = scmp.eq.s32.totalorder %s24, 0
      %p101 = por %p99, %p100
      %p102 = scmp.ne.s32.totalorder %s90, %s91
      %p103 = scmp.eq.s32.totalorder %s25, 1
      %p104 = por %p102, %p103
      %p106 = scmp.ne.s32.totalorder %s91, %s105
      %p107 = scmp.eq.s32.totalorder %s25, 0
      %p108 = por %p106, %p107
      %s109 = ssub.s32 %s26, %s38
      %s110 = ssub.s32 %s27, %s34
      %s111 = sor.u32 %s109, %s110
      %p112 = scmp.eq.s32.totalorder %s111, 0
      %s114 = sadd.s32 %s113, 1
      %s115 = scalar_select %p112, %s113, %s114
      %p118 = pneg %p112
      %p119 = scmp.eq.s32.totalorder %s19, 1
      %p120 = por %p118, %p119
      %p121 = scmp.ne.s32.totalorder %s113, %s116
      %p122 = scmp.eq.s32.totalorder %s19, 0
      %p123 = por %p121, %p122
      %p124 = scmp.ne.s32.totalorder %s113, %s116
      %p125 = scmp.eq.s32.totalorder %s24, 1
      %p126 = por %p124, %p125
      %p127 = scmp.ne.s32.totalorder %s116, %s117
      %p128 = scmp.eq.s32.totalorder %s24, 0
      %p129 = por %p127, %p128
      %p130 = scmp.ne.s32.totalorder %s116, %s117
      %p131 = scmp.eq.s32.totalorder %s25, 1
      %p132 = por %p130, %p131
      %p134 = scmp.ne.s32.totalorder %s117, %s133
      %p135 = scmp.eq.s32.totalorder %s25, 0
      %p136 = por %p134, %p135
      %s137 = ssub.s32 %s26, %s38
      %s138 = ssub.s32 %s27, %s34
      %s139 = sor.u32 %s137, %s138
      %p140 = scmp.eq.s32.totalorder %s139, 0
      %s142 = sadd.s32 %s141, 1
      %s143 = scalar_select %p140, %s141, %s142
      %p146 = pneg %p140
      %p147 = scmp.eq.s32.totalorder %s19, 1
      %p148 = por %p146, %p147
      %p149 = scmp.ne.s32.totalorder %s141, %s144
      %p150 = scmp.eq.s32.totalorder %s19, 0
      %p151 = por %p149, %p150
      %p152 = scmp.ne.s32.totalorder %s141, %s144
      %p153 = scmp.eq.s32.totalorder %s24, 1
      %p154 = por %p152, %p153
      %p155 = scmp.ne.s32.totalorder %s144, %s145
      %p156 = scmp.eq.s32.totalorder %s24, 0
      %p157 = por %p155, %p156
      %p158 = scmp.ne.s32.totalorder %s144, %s145
      %p159 = scmp.eq.s32.totalorder %s25, 1
      %p160 = por %p158, %p159
      %p162 = scmp.ne.s32.totalorder %s145, %s161
      %p163 = scmp.eq.s32.totalorder %s25, 0
      %p164 = por %p162, %p163
      %s165 = ssub.s32 %s26, %s38
      %p166 = scmp.eq.s32.totalorder %s165, 0
      %s168 = sadd.s32 %s167, 1
      %s169 = scalar_select %p166, %s167, %s168
      %p172 = pneg %p166
      %p173 = scmp.eq.s32.totalorder %s19, 1
      %p174 = por %p172, %p173
      %p175 = scmp.ne.s32.totalorder %s167, %s170
      %p176 = scmp.eq.s32.totalorder %s19, 0
      %p177 = por %p175, %p176
      %p178 = scmp.ne.s32.totalorder %s167, %s170
      %p179 = scmp.eq.s32.totalorder %s24, 1
      %p180 = por %p178, %p179
      %p181 = scmp.ne.s32.totalorder %s170, %s171
      %p182 = scmp.eq.s32.totalorder %s24, 0
      %p183 = por %p181, %p182
      %p184 = scmp.ne.s32.totalorder %s170, %s171
      %p185 = scmp.eq.s32.totalorder %s25, 1
      %p186 = por %p184, %p185
      %p188 = scmp.ne.s32.totalorder %s171, %s187
      %p189 = scmp.eq.s32.totalorder %s25, 0
      %p190 = por %p188, %p189
      %s191 = ssub.s32 %s26, %s38
      %p192 = scmp.eq.s32.totalorder %s191, 0
      %s194 = sadd.s32 %s193, 1
      %s195 = scalar_select %p192, %s193, %s194
      %p198 = pneg %p192
      %p199 = scmp.eq.s32.totalorder %s19, 1
      %p200 = por %p198, %p199
      %p201 = scmp.ne.s32.totalorder %s193, %s196
      %p202 = scmp.eq.s32.totalorder %s19, 0
      %p203 = por %p201, %p202
      %p204 = scmp.ne.s32.totalorder %s193, %s196
      %p205 = scmp.eq.s32.totalorder %s24, 1
      %p206 = por %p204, %p205
      %p207 = scmp.ne.s32.totalorder %s196, %s197
      %p208 = scmp.eq.s32.totalorder %s24, 0
      %p209 = por %p207, %p208
      %p210 = scmp.ne.s32.totalorder %s196, %s197
      %p211 = scmp.eq.s32.totalorder %s25, 1
      %p212 = por %p210, %p211
      %p214 = scmp.ne.s32.totalorder %s197, %s213
      %p215 = scmp.eq.s32.totalorder %s25, 0
      %p216 = por %p214, %p215
      %p217 = scmp.le.s32.totalorder 1, %s19
      %p218 = scmp.lt.s32.totalorder %s19, 3
      %p219 = pnand %p217, %p218
      %p220 = pneg %p219
      // Predicated region
      $region9: #{tpu_custom_call.1} parent=5 // pred_check
        _
      $region10: #{tpu_custom_call.1} parent=5 // pred_check_branch
        %222 = sbr.rel (%p219) target = $region12
      $region11: #{tpu_custom_call.1} parent=5 // pred_region
        %s223 = ssub.s32 %s19, 1
        // Predicated region
        $region13: #{tpu_custom_call.1} parent=11 // pred_check
          %p224 = pneg %p80
        $region14: #{tpu_custom_call.1} parent=11 // pred_check_branch
          %226 = sbr.rel (%p224) target = $region16
        $region15: #{tpu_custom_call.1} parent=11 // pred_region
          _
        $region16: #{tpu_custom_call.1} parent=11 // pred_fallthru
          _
        // Predicated region
        $region17: #{tpu_custom_call.1} parent=11 // pred_check
          %p227 = pneg %p101
        $region18: #{tpu_custom_call.1} parent=11 // pred_check_branch
          %229 = sbr.rel (%p227) target = $region20
        $region19: #{tpu_custom_call.1} parent=11 // pred_region
          _
        $region20: #{tpu_custom_call.1} parent=11 // pred_fallthru
          _
      $region12: #{tpu_custom_call.1} parent=5 // pred_fallthru
        _
      %p230 = scmp.lt.s32.totalorder %s19, 2
      // Predicated region
      $region21: #{tpu_custom_call.1} parent=5 // pred_check
        %p231 = pneg %p230
      $region22: #{tpu_custom_call.1} parent=5 // pred_check_branch
        %233 = sbr.rel (%p231) target = $region24
      $region23: #{tpu_custom_call.1} parent=5 // pred_region
        // Predicated region
        $region25: #{tpu_custom_call.1} parent=23 // pred_check
          %p234 = pneg %p53
        $region26: #{tpu_custom_call.1} parent=23 // pred_check_branch
          %236 = sbr.rel (%p234) target = $region28
        $region27: #{tpu_custom_call.1} parent=23 // pred_region
          %s237 = smul.u32 2, %s27
          %p238 = scmp.lt.s32.totalorder %s26, 1
          %s239 = scalar_select %p238, %s26, 1
          %p240 = scmp.lt.s32.totalorder %s237, 1
          %s241 = scalar_select %p240, %s237, 1
          %s242 = smul.addr %s239, 16
          %s243 = sadd.s32 %s241, %s242
          %s244 = smul.addr %s243, 8
          %s245 = scalar_lea.vmem %s0, %s244
          %s246 = smul.u32 2, %s27
        $region28: #{tpu_custom_call.1} parent=23 // pred_fallthru
          _
      $region24: #{tpu_custom_call.1} parent=5 // pred_fallthru
        _
      %p247 = scmp.le.s32.totalorder 1, %s19
      %p248 = scmp.lt.s32.totalorder %s19, 3
      %p249 = pnand %p247, %p248
      %p250 = pneg %p249
      // Predicated region
      $region29: #{tpu_custom_call.1} parent=5 // pred_check
        _
      $region30: #{tpu_custom_call.1} parent=5 // pred_check_branch
        %252 = sbr.rel (%p249) target = $region32
      $region31: #{tpu_custom_call.1} parent=5 // pred_region
        %s253 = ssub.s32 %s19, 1
        %s254 = smul.u32 2, %s29
        %p255 = scmp.lt.s32.totalorder %s28, 1
        %s256 = scalar_select %p255, %s28, 1
        %p257 = scmp.lt.s32.totalorder %s254, 1
        %s258 = scalar_select %p257, %s254, 1
        %s259 = smul.addr %s256, 16
        %s260 = sadd.s32 %s258, %s259
        %s261 = smul.addr %s260, 8
        %s262 = scalar_lea.vmem %s0, %s261
        %p263 = pneg %p59
        %p264 = pneg %p56
        %p265 = pneg %p80
        %p266 = pneg %p77
        %p267 = pneg %p101
        %p268 = pneg %p98
        %p269 = pneg %p129
        %p270 = pneg %p126
        %s271 = sand.u32 %s116, 1
        %s272 = scalar_lea.sflag [#allocation3], %s271
        %s273 = sand.u32 %s116, 1
        %s274 = smul.addr %s273, 128
        %s275 = scalar_lea.vmem [#allocation2], %s274
        %p276 = pneg %p157
        %p277 = pneg %p154
        %s278 = sand.u32 %s144, 1
        %s279 = scalar_lea.sflag [#allocation5], %s278
        %s280 = sand.u32 %s144, 1
        %s281 = smul.addr %s280, 2
        %s282 = scalar_lea.vmem [#allocation4], %s281
        %p283 = pneg %p183
        %p284 = pneg %p180
        %p285 = scmp.lt.s32.totalorder %s28, 1
        %s286 = scalar_select %p285, %s28, 1
        %s287 = scalar_lea.vmem %s5, %s286
        %p288 = pneg %p209
        %p289 = pneg %p206
        %p290 = scmp.lt.s32.totalorder %s28, 1
        %s291 = scalar_select %p290, %s28, 1
        %s292 = smul.addr %s291, 13
        %s293 = smul.addr %s292, 8
        %s294 = scalar_lea.vmem %s6, %s293
        %s295 = smul.u32 2, %s29
        %p296 = scmp.lt.s32.totalorder %s28, 1
        %s297 = scalar_select %p296, %s28, 1
        %p298 = scmp.lt.s32.totalorder %s295, 1
        %s299 = scalar_select %p298, %s295, 1
        %s300 = smul.addr %s297, 16
        %s301 = sadd.s32 %s299, %s300
        %s302 = smul.addr %s301, 8
        %s303 = scalar_lea.vmem %s0, %s302
        %s304 = smul.u32 2, %s29
        %s305 = smul.u32 2, %s29
        %s306 = smul.u32 2, %s29
        %p307 = scmp.lt.s32.totalorder %s28, 1
        %s308 = scalar_select %p307, %s28, 1
        %s309 = scalar_lea.vmem %s5, %s308
        %p310 = scmp.lt.s32.totalorder %s28, 1
        %s311 = scalar_select %p310, %s28, 1
        %s312 = smul.addr %s311, 13
        %s313 = smul.addr %s312, 8
        %s314 = scalar_lea.vmem %s6, %s313
        %p315 = scmp.eq.s32.totalorder %s29, 0
        // Predicated region
        $region33: #{tpu_custom_call.1} parent=31 // pred_check
          %p316 = pneg %p315
        $region34: #{tpu_custom_call.1} parent=31 // pred_check_branch
          %318 = sbr.rel (%p316) target = $region36
        $region35: #{tpu_custom_call.1} parent=31 // pred_region
          %vm319 = vcmask 0
          %320 = vst.msk [vmem:[%s309] sm:$0x1] %vm319, 0.0
          %vm321 = vcmask 7168
          %322 = vst.msk [vmem:[%s314] sm:$0xff] %vm321, 0.0
          %323 = vst.msk [vmem:[%s314 + $0x8] sm:$0xff] %vm321, 0.0
          %324 = vst.msk [vmem:[%s314 + $0x10] sm:$0xff] %vm321, 0.0
          %325 = vst.msk [vmem:[%s314 + $0x18] sm:$0xff] %vm321, 0.0
          %326 = vst.msk [vmem:[%s314 + $0x20] sm:$0xff] %vm321, 0.0
          %327 = vst.msk [vmem:[%s314 + $0x28] sm:$0xff] %vm321, 0.0
          %328 = vst.msk [vmem:[%s314 + $0x30] sm:$0xff] %vm321, 0.0
          %329 = vst.msk [vmem:[%s314 + $0x38] sm:$0xff] %vm321, 0.0
          %330 = vst.msk [vmem:[%s314 + $0x40] sm:$0xff] %vm321, 0.0
          %331 = vst.msk [vmem:[%s314 + $0x48] sm:$0xff] %vm321, 0.0
          %332 = vst.msk [vmem:[%s314 + $0x50] sm:$0xff] %vm321, 0.0
          %333 = vst.msk [vmem:[%s314 + $0x58] sm:$0xff] %vm321, 0.0
          %334 = vst.msk [vmem:[%s314 + $0x60] sm:$0xff] %vm321, 0.0
        $region36: #{tpu_custom_call.1} parent=31 // pred_fallthru
          _
        %v335 = vld [vmem:[%s303] sm:$0xff]
        %v336 = vld [vmem:[%s303 + $0x8] sm:$0xff]
        %v337 = vld [vmem:[%s303 + $0x10] sm:$0xff]
        %v338 = vld [vmem:[%s303 + $0x18] sm:$0xff]
        %v339 = vld [vmem:[%s303 + $0x20] sm:$0xff]
        %v340 = vld [vmem:[%s303 + $0x28] sm:$0xff]
        %v341 = vld [vmem:[%s303 + $0x30] sm:$0xff]
        %v342 = vld [vmem:[%s303 + $0x38] sm:$0xff]
        %v343 = vld [vmem:[%s303 + $0x40] sm:$0xff]
        %v344 = vld [vmem:[%s303 + $0x48] sm:$0xff]
        %v345 = vld [vmem:[%s303 + $0x50] sm:$0xff]
        %v346 = vld [vmem:[%s303 + $0x58] sm:$0xff]
        %v347 = vld [vmem:[%s303 + $0x60] sm:$0xff]
        %v348 = vld [vmem:[%s303 + $0x68] sm:$0xff]
        %v349 = vld [vmem:[%s303 + $0x70] sm:$0xff]
        %v350 = vld [vmem:[%s303 + $0x78] sm:$0xff]
        %v351 = vld [vmem:[%s1] sm:$0xff]
        %v352 = vld [vmem:[%s1 + $0x8] sm:$0xff]
        %v353 = vld [vmem:[%s1 + $0x10] sm:$0xff]
        %v354 = vld [vmem:[%s1 + $0x18] sm:$0xff]
        %v355 = vld [vmem:[%s1 + $0x20] sm:$0xff]
        %v356 = vld [vmem:[%s1 + $0x28] sm:$0xff]
        %v357 = vld [vmem:[%s1 + $0x30] sm:$0xff]
        %v358 = vld [vmem:[%s1 + $0x38] sm:$0xff]
        %v359 = vld [vmem:[%s1 + $0x40] sm:$0xff]
        %v360 = vld [vmem:[%s1 + $0x48] sm:$0xff]
        %v361 = vld [vmem:[%s1 + $0x50] sm:$0xff]
        %v362 = vld [vmem:[%s1 + $0x58] sm:$0xff]
        %v363 = vld [vmem:[%s1 + $0x60] sm:$0xff]
        %vm364 = vcmask 523264
        %v366 = vsel %vm364, %v351, 0
        %v369 = vsel %vm364, %v352, 0
        %v372 = vsel %vm364, %v353, 0
        %v375 = vsel %vm364, %v354, 0
        %v378 = vsel %vm364, %v355, 0
        %v381 = vsel %vm364, %v356, 0
        %v384 = vsel %vm364, %v357, 0
        %v387 = vsel %vm364, %v358, 0
        %v390 = vsel %vm364, %v359, 0
        %v393 = vsel %vm364, %v360, 0
        %v396 = vsel %vm364, %v361, 0
        %v399 = vsel %vm364, %v362, 0
        %v402 = vsel %vm364, %v363, 0
        %404 = vmatpush.msra.mxu0 0.0
        %405 = vmatpush.msra.mxu0 0.0
        %406 = vmatpush.msra.mxu0 0.0
        %407 = vmatpush.msra.mxu0 0.0
        %408 = vmatpush.msra.mxu0 0.0
        %409 = vmatpush.msra.mxu0 0.0
        %410 = vmatpush.msra.mxu0 0.0
        %411 = vmatpush.msra.mxu0 0.0
        %412 = vmatpush.msra.mxu0 %v349
        %413 = vmatpush.msra.mxu0 %v347
        %414 = vmatpush.msra.mxu0 %v345
        %415 = vmatpush.msra.mxu0 %v343
        %416 = vmatpush.msra.mxu0 %v341
        %417 = vmatpush.msra.mxu0 %v339
        %418 = vmatpush.msra.mxu0 %v337
        %419 = vmatpush.msra.mxu0 %v335
        %420 = vmatmul.f32.gmra.mxu0 %v366
        %v421 = vpop.f32.mrf.mxu0
        %v422 = vadd.f32 0.0, %v421
        %423 = vmatmul.f32.gmra.mxu0 %v369
        %v424 = vpop.f32.mrf.mxu0
        %v425 = vadd.f32 0.0, %v424
        %426 = vmatmul.f32.gmra.mxu0 %v372
        %v427 = vpop.f32.mrf.mxu0
        %v428 = vadd.f32 0.0, %v427
        %429 = vmatmul.f32.gmra.mxu0 %v375
        %v430 = vpop.f32.mrf.mxu0
        %v431 = vadd.f32 0.0, %v430
        %432 = vmatmul.f32.gmra.mxu0 %v378
        %v433 = vpop.f32.mrf.mxu0
        %v434 = vadd.f32 0.0, %v433
        %435 = vmatmul.f32.gmra.mxu0 %v381
        %v436 = vpop.f32.mrf.mxu0
        %v437 = vadd.f32 0.0, %v436
        %438 = vmatmul.f32.gmra.mxu0 %v384
        %v439 = vpop.f32.mrf.mxu0
        %v440 = vadd.f32 0.0, %v439
        %441 = vmatmul.f32.gmra.mxu0 %v387
        %v442 = vpop.f32.mrf.mxu0
        %v443 = vadd.f32 0.0, %v442
        %444 = vmatmul.f32.gmra.mxu0 %v390
        %v445 = vpop.f32.mrf.mxu0
        %v446 = vadd.f32 0.0, %v445
        %447 = vmatmul.f32.gmra.mxu0 %v393
        %v448 = vpop.f32.mrf.mxu0
        %v449 = vadd.f32 0.0, %v448
        %450 = vmatmul.f32.gmra.mxu0 %v396
        %v451 = vpop.f32.mrf.mxu0
        %v452 = vadd.f32 0.0, %v451
        %453 = vmatmul.f32.gmra.mxu0 %v399
        %v454 = vpop.f32.mrf.mxu0
        %v455 = vadd.f32 0.0, %v454
        %456 = vmatmul.f32.gmra.mxu0 %v402
        %v457 = vpop.f32.mrf.mxu0
        %v458 = vadd.f32 0.0, %v457
        %459 = vdwg.mxu0
        %460 = vmatpush.msra.mxu0 0.0
        %461 = vmatpush.msra.mxu0 0.0
        %462 = vmatpush.msra.mxu0 0.0
        %463 = vmatpush.msra.mxu0 0.0
        %464 = vmatpush.msra.mxu0 0.0
        %465 = vmatpush.msra.mxu0 0.0
        %466 = vmatpush.msra.mxu0 0.0
        %467 = vmatpush.msra.mxu0 0.0
        %468 = vmatpush.msra.mxu0 %v350
        %469 = vmatpush.msra.mxu0 %v348
        %470 = vmatpush.msra.mxu0 %v346
        %471 = vmatpush.msra.mxu0 %v344
        %472 = vmatpush.msra.mxu0 %v342
        %473 = vmatpush.msra.mxu0 %v340
        %474 = vmatpush.msra.mxu0 %v338
        %475 = vmatpush.msra.mxu0 %v336
        %476 = vmatmul.f32.gmra.mxu0 %v366
        %v477 = vpop.f32.mrf.mxu0
        %v478 = vadd.f32 0.0, %v477
        %479 = vmatmul.f32.gmra.mxu0 %v369
        %v480 = vpop.f32.mrf.mxu0
        %v481 = vadd.f32 0.0, %v480
        %482 = vmatmul.f32.gmra.mxu0 %v372
        %v483 = vpop.f32.mrf.mxu0
        %v484 = vadd.f32 0.0, %v483
        %485 = vmatmul.f32.gmra.mxu0 %v375
        %v486 = vpop.f32.mrf.mxu0
        %v487 = vadd.f32 0.0, %v486
        %488 = vmatmul.f32.gmra.mxu0 %v378
        %v489 = vpop.f32.mrf.mxu0
        %v490 = vadd.f32 0.0, %v489
        %491 = vmatmul.f32.gmra.mxu0 %v381
        %v492 = vpop.f32.mrf.mxu0
        %v493 = vadd.f32 0.0, %v492
        %494 = vmatmul.f32.gmra.mxu0 %v384
        %v495 = vpop.f32.mrf.mxu0
        %v496 = vadd.f32 0.0, %v495
        %497 = vmatmul.f32.gmra.mxu0 %v387
        %v498 = vpop.f32.mrf.mxu0
        %v499 = vadd.f32 0.0, %v498
        %500 = vmatmul.f32.gmra.mxu0 %v390
        %v501 = vpop.f32.mrf.mxu0
        %v502 = vadd.f32 0.0, %v501
        %503 = vmatmul.f32.gmra.mxu0 %v393
        %v504 = vpop.f32.mrf.mxu0
        %v505 = vadd.f32 0.0, %v504
        %506 = vmatmul.f32.gmra.mxu0 %v396
        %v507 = vpop.f32.mrf.mxu0
        %v508 = vadd.f32 0.0, %v507
        %509 = vmatmul.f32.gmra.mxu0 %v399
        %v510 = vpop.f32.mrf.mxu0
        %v511 = vadd.f32 0.0, %v510
        %512 = vmatmul.f32.gmra.mxu0 %v402
        %v513 = vpop.f32.mrf.mxu0
        %v514 = vadd.f32 0.0, %v513
        %515 = vdwg.mxu0
        %v516 = vld [vmem:[%s2] sm:$0xff]
        %v517 = vld [vmem:[%s2 + $0x8] sm:$0xff]
        %v518 = vld [vmem:[%s2 + $0x10] sm:$0xff]
        %v519 = vld [vmem:[%s2 + $0x18] sm:$0xff]
        %v520 = vld [vmem:[%s2 + $0x20] sm:$0xff]
        %v521 = vld [vmem:[%s2 + $0x28] sm:$0xff]
        %v522 = vld [vmem:[%s2 + $0x30] sm:$0xff]
        %v523 = vld [vmem:[%s2 + $0x38] sm:$0xff]
        %v524 = vld [vmem:[%s2 + $0x40] sm:$0xff]
        %v525 = vld [vmem:[%s2 + $0x48] sm:$0xff]
        %v526 = vld [vmem:[%s2 + $0x50] sm:$0xff]
        %v527 = vld [vmem:[%s2 + $0x58] sm:$0xff]
        %v528 = vld [vmem:[%s2 + $0x60] sm:$0xff]
        %v529 = vmul.f32 %v422, 2.0
        %v530 = vmul.f32 %v478, 2.0
        %v531 = vmul.f32 %v425, 2.0
        %v532 = vmul.f32 %v481, 2.0
        %v533 = vmul.f32 %v428, 2.0
        %v534 = vmul.f32 %v484, 2.0
        %v535 = vmul.f32 %v431, 2.0
        %v536 = vmul.f32 %v487, 2.0
        %v537 = vmul.f32 %v434, 2.0
        %v538 = vmul.f32 %v490, 2.0
        %v539 = vmul.f32 %v437, 2.0
        %v540 = vmul.f32 %v493, 2.0
        %v541 = vmul.f32 %v440, 2.0
        %v542 = vmul.f32 %v496, 2.0
        %v543 = vmul.f32 %v443, 2.0
        %v544 = vmul.f32 %v499, 2.0
        %v545 = vmul.f32 %v446, 2.0
        %v546 = vmul.f32 %v502, 2.0
        %v547 = vmul.f32 %v449, 2.0
        %v548 = vmul.f32 %v505, 2.0
        %v549 = vmul.f32 %v452, 2.0
        %v550 = vmul.f32 %v508, 2.0
        %v551 = vmul.f32 %v455, 2.0
        %v552 = vmul.f32 %v511, 2.0
        %v553 = vmul.f32 %v458, 2.0
        %v554 = vmul.f32 %v514, 2.0
        %556 = vset.pattern.permute.xlu0 0
        %557 = vperm.xlu0 %556, %v516
        %v558 = vpop.permute.xlu0 %557
        %561 = vset.pattern.permute.xlu0 0
        %562 = vperm.xlu0 %561, %v517
        %v563 = vpop.permute.xlu0 %562
        %566 = vset.pattern.permute.xlu0 0
        %567 = vperm.xlu0 %566, %v518
        %v568 = vpop.permute.xlu0 %567
        %571 = vset.pattern.permute.xlu0 0
        %572 = vperm.xlu0 %571, %v519
        %v573 = vpop.permute.xlu0 %572
        %576 = vset.pattern.permute.xlu0 0
        %577 = vperm.xlu0 %576, %v520
        %v578 = vpop.permute.xlu0 %577
        %581 = vset.pattern.permute.xlu0 0
        %582 = vperm.xlu0 %581, %v521
        %v583 = vpop.permute.xlu0 %582
        %586 = vset.pattern.permute.xlu0 0
        %587 = vperm.xlu0 %586, %v522
        %v588 = vpop.permute.xlu0 %587
        %591 = vset.pattern.permute.xlu0 0
        %592 = vperm.xlu0 %591, %v523
        %v593 = vpop.permute.xlu0 %592
        %596 = vset.pattern.permute.xlu0 0
        %597 = vperm.xlu0 %596, %v524
        %v598 = vpop.permute.xlu0 %597
        %601 = vset.pattern.permute.xlu0 0
        %602 = vperm.xlu0 %601, %v525
        %v603 = vpop.permute.xlu0 %602
        %606 = vset.pattern.permute.xlu0 0
        %607 = vperm.xlu0 %606, %v526
        %v608 = vpop.permute.xlu0 %607
        %611 = vset.pattern.permute.xlu0 0
        %612 = vperm.xlu0 %611, %v527
        %v613 = vpop.permute.xlu0 %612
        %616 = vset.pattern.permute.xlu0 0
        %617 = vperm.xlu0 %616, %v528
        %v618 = vpop.permute.xlu0 %617
        %v620 = vsub.f32 %v558, %v529
        %v621 = vsub.f32 %v558, %v530
        %v622 = vsub.f32 %v563, %v531
        %v623 = vsub.f32 %v563, %v532
        %v624 = vsub.f32 %v568, %v533
        %v625 = vsub.f32 %v568, %v534
        %v626 = vsub.f32 %v573, %v535
        %v627 = vsub.f32 %v573, %v536
        %v628 = vsub.f32 %v578, %v537
        %v629 = vsub.f32 %v578, %v538
        %v630 = vsub.f32 %v583, %v539
        %v631 = vsub.f32 %v583, %v540
        %v632 = vsub.f32 %v588, %v541
        %v633 = vsub.f32 %v588, %v542
        %v634 = vsub.f32 %v593, %v543
        %v635 = vsub.f32 %v593, %v544
        %v636 = vsub.f32 %v598, %v545
        %v637 = vsub.f32 %v598, %v546
        %v638 = vsub.f32 %v603, %v547
        %v639 = vsub.f32 %v603, %v548
        %v640 = vsub.f32 %v608, %v549
        %v641 = vsub.f32 %v608, %v550
        %v642 = vsub.f32 %v613, %v551
        %v643 = vsub.f32 %v613, %v552
        %v644 = vsub.f32 %v618, %v553
        %v645 = vsub.f32 %v618, %v554
        %v646 = vmin.f32 %v620, %v624
        %v647 = vmin.f32 %v622, %v626
        %v648 = vmin.f32 %v646, %v628
        %v649 = vmin.f32 %v647, %v630
        %v650 = vmin.f32 %v648, %v632
        %v651 = vmin.f32 %v649, %v634
        %v652 = vmin.f32 %v650, %v636
        %v653 = vmin.f32 %v651, %v638
        %v654 = vmin.f32 %v652, %v640
        %v655 = vmin.f32 %v653, %v642
        %v656 = vmin.f32 %v654, %v644
        %v657 = vmin.f32 %v656, %v655
        %v658 = vrot.slane %v657, 4
        %v659 = vmin.f32 %v657, %v658
        %v660 = vrot.slane %v659, 2
        %v661 = vmin.f32 %v659, %v660
        %v662 = vrot.slane %v661, 1
        %v663 = vmin.f32 %v661, %v662
        %v664 = vmin.f32 %v621, %v625
        %v665 = vmin.f32 %v623, %v627
        %v666 = vmin.f32 %v664, %v629
        %v667 = vmin.f32 %v665, %v631
        %v668 = vmin.f32 %v666, %v633
        %v669 = vmin.f32 %v667, %v635
        %v670 = vmin.f32 %v668, %v637
        %v671 = vmin.f32 %v669, %v639
        %v672 = vmin.f32 %v670, %v641
        %v673 = vmin.f32 %v671, %v643
        %v674 = vmin.f32 %v672, %v645
        %v675 = vmin.f32 %v674, %v673
        %v676 = vrot.slane %v675, 4
        %v677 = vmin.f32 %v675, %v676
        %v678 = vrot.slane %v677, 2
        %v679 = vmin.f32 %v677, %v678
        %v680 = vrot.slane %v679, 1
        %v681 = vmin.f32 %v679, %v680
        %v682 = vlaneseq
        %v683 = vshrl.u32 %v682, 7
        %v684 = vadd.s32 %v683, 8
        %v685 = vadd.s32 %v683, 16
        %v686 = vadd.s32 %v683, 24
        %v687 = vadd.s32 %v683, 32
        %v688 = vadd.s32 %v683, 40
        %v689 = vadd.s32 %v683, 48
        %v690 = vadd.s32 %v683, 56
        %v691 = vadd.s32 %v683, 64
        %v692 = vadd.s32 %v683, 72
        %v693 = vadd.s32 %v683, 80
        %v694 = vadd.s32 %v683, 88
        %v695 = vadd.s32 %v683, 96
        %vm696 = vcmp.eq.f32.partialorder %v620, %v663
        %vm697 = vcmp.eq.f32.partialorder %v621, %v681
        %vm698 = vcmp.eq.f32.partialorder %v622, %v663
        %vm699 = vcmp.eq.f32.partialorder %v623, %v681
        %vm700 = vcmp.eq.f32.partialorder %v624, %v663
        %vm701 = vcmp.eq.f32.partialorder %v625, %v681
        %vm702 = vcmp.eq.f32.partialorder %v626, %v663
        %vm703 = vcmp.eq.f32.partialorder %v627, %v681
        %vm704 = vcmp.eq.f32.partialorder %v628, %v663
        %vm705 = vcmp.eq.f32.partialorder %v629, %v681
        %vm706 = vcmp.eq.f32.partialorder %v630, %v663
        %vm707 = vcmp.eq.f32.partialorder %v631, %v681
        %vm708 = vcmp.eq.f32.partialorder %v632, %v663
        %vm709 = vcmp.eq.f32.partialorder %v633, %v681
        %vm710 = vcmp.eq.f32.partialorder %v634, %v663
        %vm711 = vcmp.eq.f32.partialorder %v635, %v681
        %vm712 = vcmp.eq.f32.partialorder %v636, %v663
        %vm713 = vcmp.eq.f32.partialorder %v637, %v681
        %vm714 = vcmp.eq.f32.partialorder %v638, %v663
        %vm715 = vcmp.eq.f32.partialorder %v639, %v681
        %vm716 = vcmp.eq.f32.partialorder %v640, %v663
        %vm717 = vcmp.eq.f32.partialorder %v641, %v681
        %vm718 = vcmp.eq.f32.partialorder %v642, %v663
        %vm719 = vcmp.eq.f32.partialorder %v643, %v681
        %vm720 = vcmp.eq.f32.partialorder %v644, %v663
        %vm721 = vcmp.eq.f32.partialorder %v645, %v681
        %v722 = vsel %vm696, %v683, 104
        %v723 = vsel %vm697, %v683, 104
        %v724 = vsel %vm698, %v684, 104
        %v725 = vsel %vm699, %v684, 104
        %v726 = vsel %vm700, %v685, 104
        %v727 = vsel %vm701, %v685, 104
        %v728 = vsel %vm702, %v686, 104
        %v729 = vsel %vm703, %v686, 104
        %v730 = vsel %vm704, %v687, 104
        %v731 = vsel %vm705, %v687, 104
        %v732 = vsel %vm706, %v688, 104
        %v733 = vsel %vm707, %v688, 104
        %v734 = vsel %vm708, %v689, 104
        %v735 = vsel %vm709, %v689, 104
        %v736 = vsel %vm710, %v690, 104
        %v737 = vsel %vm711, %v690, 104
        %v738 = vsel %vm712, %v691, 104
        %v739 = vsel %vm713, %v691, 104
        %v740 = vsel %vm714, %v692, 104
        %v741 = vsel %vm715, %v692, 104
        %v742 = vsel %vm716, %v693, 104
        %v743 = vsel %vm717, %v693, 104
        %v744 = vsel %vm718, %v694, 104
        %v745 = vsel %vm719, %v694, 104
        %v746 = vsel %vm720, %v695, 104
        %v747 = vsel %vm721, %v695, 104
        %vm748 = vcmp.lt.s32.totalorder %v722, %v726
        %v749 = vsel %vm748, %v722, %v726
        %vm750 = vcmp.lt.s32.totalorder %v724, %v728
        %v751 = vsel %vm750, %v724, %v728
        %vm752 = vcmp.lt.s32.totalorder %v749, %v730
        %v753 = vsel %vm752, %v749, %v730
        %vm754 = vcmp.lt.s32.totalorder %v751, %v732
        %v755 = vsel %vm754, %v751, %v732
        %vm756 = vcmp.lt.s32.totalorder %v753, %v734
        %v757 = vsel %vm756, %v753, %v734
        %vm758 = vcmp.lt.s32.totalorder %v755, %v736
        %v759 = vsel %vm758, %v755, %v736
        %vm760 = vcmp.lt.s32.totalorder %v757, %v738
        %v761 = vsel %vm760, %v757, %v738
        %vm762 = vcmp.lt.s32.totalorder %v759, %v740
        %v763 = vsel %vm762, %v759, %v740
        %vm764 = vcmp.lt.s32.totalorder %v761, %v742
        %v765 = vsel %vm764, %v761, %v742
        %vm766 = vcmp.lt.s32.totalorder %v763, %v744
        %v767 = vsel %vm766, %v763, %v744
        %vm768 = vcmp.lt.s32.totalorder %v765, %v746
        %v769 = vsel %vm768, %v765, %v746
        %vm770 = vcmp.lt.s32.totalorder %v769, %v767
        %v771 = vsel %vm770, %v769, %v767
        %v772 = vrot.slane %v771, 4
        %vm773 = vcmp.lt.s32.totalorder %v771, %v772
        %v774 = vsel %vm773, %v771, %v772
        %v775 = vrot.slane %v774, 2
        %vm776 = vcmp.lt.s32.totalorder %v774, %v775
        %v777 = vsel %vm776, %v774, %v775
        %v778 = vrot.slane %v777, 1
        %vm779 = vcmp.lt.s32.totalorder %v777, %v778
        %v780 = vsel %vm779, %v777, %v778
        %vm781 = vcmp.lt.s32.totalorder %v723, %v727
        %v782 = vsel %vm781, %v723, %v727
        %vm783 = vcmp.lt.s32.totalorder %v725, %v729
        %v784 = vsel %vm783, %v725, %v729
        %vm785 = vcmp.lt.s32.totalorder %v782, %v731
        %v786 = vsel %vm785, %v782, %v731
        %vm787 = vcmp.lt.s32.totalorder %v784, %v733
        %v788 = vsel %vm787, %v784, %v733
        %vm789 = vcmp.lt.s32.totalorder %v786, %v735
        %v790 = vsel %vm789, %v786, %v735
        %vm791 = vcmp.lt.s32.totalorder %v788, %v737
        %v792 = vsel %vm791, %v788, %v737
        %vm793 = vcmp.lt.s32.totalorder %v790, %v739
        %v794 = vsel %vm793, %v790, %v739
        %vm795 = vcmp.lt.s32.totalorder %v792, %v741
        %v796 = vsel %vm795, %v792, %v741
        %vm797 = vcmp.lt.s32.totalorder %v794, %v743
        %v798 = vsel %vm797, %v794, %v743
        %vm799 = vcmp.lt.s32.totalorder %v796, %v745
        %v800 = vsel %vm799, %v796, %v745
        %vm801 = vcmp.lt.s32.totalorder %v798, %v747
        %v802 = vsel %vm801, %v798, %v747
        %vm803 = vcmp.lt.s32.totalorder %v802, %v800
        %v804 = vsel %vm803, %v802, %v800
        %v805 = vrot.slane %v804, 4
        %vm806 = vcmp.lt.s32.totalorder %v804, %v805
        %v807 = vsel %vm806, %v804, %v805
        %v808 = vrot.slane %v807, 2
        %vm809 = vcmp.lt.s32.totalorder %v807, %v808
        %v810 = vsel %vm809, %v807, %v808
        %v811 = vrot.slane %v810, 1
        %vm812 = vcmp.lt.s32.totalorder %v810, %v811
        %v813 = vsel %vm812, %v810, %v811
        %v814 = vrot.slane %v813, 7
        %vm815 = vcmask 1040384
        %v816 = vsel %vm815, %v780, %v814
        %v817 = vlaneseq
        %vm818 = vcmp.ge.s32.totalorder %v817, 0
        %vm819 = vcmp.lt.s32.totalorder %v817, 256
        %vm820 = vmand %vm818, %vm819
        %821 = vst.msk [vmem:[%s282] sm:$0x3] %vm820, %v816
        %vm822 = vcmp.eq.s32.totalorder %v683, %v780
        %vm823 = vcmp.eq.s32.totalorder %v683, %v813
        %vm824 = vcmp.eq.s32.totalorder %v684, %v780
        %vm825 = vcmp.eq.s32.totalorder %v684, %v813
        %vm826 = vcmp.eq.s32.totalorder %v685, %v780
        %vm827 = vcmp.eq.s32.totalorder %v685, %v813
        %vm828 = vcmp.eq.s32.totalorder %v686, %v780
        %vm829 = vcmp.eq.s32.totalorder %v686, %v813
        %vm830 = vcmp.eq.s32.totalorder %v687, %v780
        %vm831 = vcmp.eq.s32.totalorder %v687, %v813
        %vm832 = vcmp.eq.s32.totalorder %v688, %v780
        %vm833 = vcmp.eq.s32.totalorder %v688, %v813
        %vm834 = vcmp.eq.s32.totalorder %v689, %v780
        %vm835 = vcmp.eq.s32.totalorder %v689, %v813
        %vm836 = vcmp.eq.s32.totalorder %v690, %v780
        %vm837 = vcmp.eq.s32.totalorder %v690, %v813
        %vm838 = vcmp.eq.s32.totalorder %v691, %v780
        %vm839 = vcmp.eq.s32.totalorder %v691, %v813
        %vm840 = vcmp.eq.s32.totalorder %v692, %v780
        %vm841 = vcmp.eq.s32.totalorder %v692, %v813
        %vm842 = vcmp.eq.s32.totalorder %v693, %v780
        %vm843 = vcmp.eq.s32.totalorder %v693, %v813
        %vm844 = vcmp.eq.s32.totalorder %v694, %v780
        %vm845 = vcmp.eq.s32.totalorder %v694, %v813
        %vm846 = vcmp.eq.s32.totalorder %v695, %v780
        %vm847 = vcmp.eq.s32.totalorder %v695, %v813
        %v848 = vsel %vm822, 1, 0
        %v849 = vsel %vm823, 1, 0
        %v850 = vsel %vm824, 1, 0
        %v851 = vsel %vm825, 1, 0
        %v852 = vsel %vm826, 1, 0
        %v853 = vsel %vm827, 1, 0
        %v854 = vsel %vm828, 1, 0
        %v855 = vsel %vm829, 1, 0
        %v856 = vsel %vm830, 1, 0
        %v857 = vsel %vm831, 1, 0
        %v858 = vsel %vm832, 1, 0
        %v859 = vsel %vm833, 1, 0
        %v860 = vsel %vm834, 1, 0
        %v861 = vsel %vm835, 1, 0
        %v862 = vsel %vm836, 1, 0
        %v863 = vsel %vm837, 1, 0
        %v864 = vsel %vm838, 1, 0
        %v865 = vsel %vm839, 1, 0
        %v866 = vsel %vm840, 1, 0
        %v867 = vsel %vm841, 1, 0
        %v868 = vsel %vm842, 1, 0
        %v869 = vsel %vm843, 1, 0
        %v870 = vsel %vm844, 1, 0
        %v871 = vsel %vm845, 1, 0
        %v872 = vsel %vm846, 1, 0
        %v873 = vsel %vm847, 1, 0
        %v874 = vcvt.s32.f32 %v848
        %v875 = vcvt.s32.f32 %v849
        %v876 = vcvt.s32.f32 %v850
        %v877 = vcvt.s32.f32 %v851
        %v878 = vcvt.s32.f32 %v852
        %v879 = vcvt.s32.f32 %v853
        %v880 = vcvt.s32.f32 %v854
        %v881 = vcvt.s32.f32 %v855
        %v882 = vcvt.s32.f32 %v856
        %v883 = vcvt.s32.f32 %v857
        %v884 = vcvt.s32.f32 %v858
        %v885 = vcvt.s32.f32 %v859
        %v886 = vcvt.s32.f32 %v860
        %v887 = vcvt.s32.f32 %v861
        %v888 = vcvt.s32.f32 %v862
        %v889 = vcvt.s32.f32 %v863
        %v890 = vcvt.s32.f32 %v864
        %v891 = vcvt.s32.f32 %v865
        %v892 = vcvt.s32.f32 %v866
        %v893 = vcvt.s32.f32 %v867
        %v894 = vcvt.s32.f32 %v868
        %v895 = vcvt.s32.f32 %v869
        %v896 = vcvt.s32.f32 %v870
        %v897 = vcvt.s32.f32 %v871
        %v898 = vcvt.s32.f32 %v872
        %v899 = vcvt.s32.f32 %v873
        %900 = vxpose.xlu0.b32.start [1/16] %v351, 128
        %901 = vxpose.xlu0.b32.cont [2/16] %v352, 128
        %902 = vxpose.xlu0.b32.cont [3/16] %v353, 128
        %903 = vxpose.xlu0.b32.cont [4/16] %v354, 128
        %904 = vxpose.xlu0.b32.cont [5/16] %v355, 128
        %905 = vxpose.xlu0.b32.cont [6/16] %v356, 128
        %906 = vxpose.xlu0.b32.cont [7/16] %v357, 128
        %907 = vxpose.xlu0.b32.cont [8/16] %v358, 128
        %908 = vxpose.xlu0.b32.cont [9/16] %v359, 128
        %909 = vxpose.xlu0.b32.cont [10/16] %v360, 128
        %910 = vxpose.xlu0.b32.cont [11/16] %v361, 128
        %911 = vxpose.xlu0.b32.cont [12/16] %v362, 128
        %912 = vxpose.xlu0.b32.cont [13/16] %v363, 128
        %913 = vxpose.xlu0.b32.cont [14/16] 0.0, 128
        %914 = vxpose.xlu0.b32.cont [15/16] 0.0, 128
        %915 = vxpose.xlu0.b32.end [16/16] 0.0, 128
        %v916 = vpop.trf.xlu0
        %v917 = vpop.trf.xlu0
        %v918 = vpop.trf.xlu0
        %v919 = vpop.trf.xlu0
        %v920 = vpop.trf.xlu0
        %v921 = vpop.trf.xlu0
        %v922 = vpop.trf.xlu0
        %v923 = vpop.trf.xlu0
        %v924 = vpop.trf.xlu0
        %v925 = vpop.trf.xlu0
        %v926 = vpop.trf.xlu0
        %v927 = vpop.trf.xlu0
        %v928 = vpop.trf.xlu0
        %v929 = vpop.trf.xlu0
        %v930 = vpop.trf.xlu0
        %v931 = vpop.trf.xlu0
        %vm932 = vcmask 850944
        %v934 = vsel %vm932, %v916, 0
        %v937 = vsel %vm932, %v917, 0
        %v940 = vsel %vm932, %v918, 0
        %v943 = vsel %vm932, %v919, 0
        %v946 = vsel %vm932, %v920, 0
        %v949 = vsel %vm932, %v921, 0
        %v952 = vsel %vm932, %v922, 0
        %v955 = vsel %vm932, %v923, 0
        %957 = vmatpush.msra.mxu0 0.0
        %958 = vmatpush.msra.mxu0 0.0
        %959 = vmatpush.msra.mxu0 0.0
        %960 = vmatpush.msra.mxu0 %v898
        %961 = vmatpush.msra.mxu0 %v896
        %962 = vmatpush.msra.mxu0 %v894
        %963 = vmatpush.msra.mxu0 %v892
        %964 = vmatpush.msra.mxu0 %v890
        %965 = vmatpush.msra.mxu0 %v888
        %966 = vmatpush.msra.mxu0 %v886
        %967 = vmatpush.msra.mxu0 %v884
        %968 = vmatpush.msra.mxu0 %v882
        %969 = vmatpush.msra.mxu0 %v880
        %970 = vmatpush.msra.mxu0 %v878
        %971 = vmatpush.msra.mxu0 %v876
        %972 = vmatpush.msra.mxu0 %v874
        %973 = vmatmul.f32.gmra.mxu0 %v934
        %v974 = vpop.f32.mrf.mxu0
        %v975 = vadd.f32 0.0, %v974
        %976 = vmatmul.f32.gmra.mxu0 %v937
        %v977 = vpop.f32.mrf.mxu0
        %v978 = vadd.f32 0.0, %v977
        %979 = vmatmul.f32.gmra.mxu0 %v940
        %v980 = vpop.f32.mrf.mxu0
        %v981 = vadd.f32 0.0, %v980
        %982 = vmatmul.f32.gmra.mxu0 %v943
        %v983 = vpop.f32.mrf.mxu0
        %v984 = vadd.f32 0.0, %v983
        %985 = vmatmul.f32.gmra.mxu0 %v946
        %v986 = vpop.f32.mrf.mxu0
        %v987 = vadd.f32 0.0, %v986
        %988 = vmatmul.f32.gmra.mxu0 %v949
        %v989 = vpop.f32.mrf.mxu0
        %v990 = vadd.f32 0.0, %v989
        %991 = vmatmul.f32.gmra.mxu0 %v952
        %v992 = vpop.f32.mrf.mxu0
        %v993 = vadd.f32 0.0, %v992
        %994 = vmatmul.f32.gmra.mxu0 %v955
        %v995 = vpop.f32.mrf.mxu0
        %v996 = vadd.f32 0.0, %v995
        %997 = vdwg.mxu0
        %998 = vmatpush.msra.mxu0 0.0
        %999 = vmatpush.msra.mxu0 0.0
        %1000 = vmatpush.msra.mxu0 0.0
        %1001 = vmatpush.msra.mxu0 %v899
        %1002 = vmatpush.msra.mxu0 %v897
        %1003 = vmatpush.msra.mxu0 %v895
        %1004 = vmatpush.msra.mxu0 %v893
        %1005 = vmatpush.msra.mxu0 %v891
        %1006 = vmatpush.msra.mxu0 %v889
        %1007 = vmatpush.msra.mxu0 %v887
        %1008 = vmatpush.msra.mxu0 %v885
        %1009 = vmatpush.msra.mxu0 %v883
        %1010 = vmatpush.msra.mxu0 %v881
        %1011 = vmatpush.msra.mxu0 %v879
        %1012 = vmatpush.msra.mxu0 %v877
        %1013 = vmatpush.msra.mxu0 %v875
        %1014 = vmatmul.f32.gmra.mxu0 %v934
        %v1015 = vpop.f32.mrf.mxu0
        %v1016 = vadd.f32 0.0, %v1015
        %1017 = vmatmul.f32.gmra.mxu0 %v937
        %v1018 = vpop.f32.mrf.mxu0
        %v1019 = vadd.f32 0.0, %v1018
        %1020 = vmatmul.f32.gmra.mxu0 %v940
        %v1021 = vpop.f32.mrf.mxu0
        %v1022 = vadd.f32 0.0, %v1021
        %1023 = vmatmul.f32.gmra.mxu0 %v943
        %v1024 = vpop.f32.mrf.mxu0
        %v1025 = vadd.f32 0.0, %v1024
        %1026 = vmatmul.f32.gmra.mxu0 %v946
        %v1027 = vpop.f32.mrf.mxu0
        %v1028 = vadd.f32 0.0, %v1027
        %1029 = vmatmul.f32.gmra.mxu0 %v949
        %v1030 = vpop.f32.mrf.mxu0
        %v1031 = vadd.f32 0.0, %v1030
        %1032 = vmatmul.f32.gmra.mxu0 %v952
        %v1033 = vpop.f32.mrf.mxu0
        %v1034 = vadd.f32 0.0, %v1033
        %1035 = vmatmul.f32.gmra.mxu0 %v955
        %v1036 = vpop.f32.mrf.mxu0
        %v1037 = vadd.f32 0.0, %v1036
        %1038 = vdwg.mxu0
        %1039 = vst [vmem:[%s275] sm:$0xff] %v975
        %1040 = vst [vmem:[%s275 + $0x8] sm:$0xff] %v1016
        %1041 = vst [vmem:[%s275 + $0x10] sm:$0xff] %v978
        %1042 = vst [vmem:[%s275 + $0x18] sm:$0xff] %v1019
        %1043 = vst [vmem:[%s275 + $0x20] sm:$0xff] %v981
        %1044 = vst [vmem:[%s275 + $0x28] sm:$0xff] %v1022
        %1045 = vst [vmem:[%s275 + $0x30] sm:$0xff] %v984
        %1046 = vst [vmem:[%s275 + $0x38] sm:$0xff] %v1025
        %1047 = vst [vmem:[%s275 + $0x40] sm:$0xff] %v987
        %1048 = vst [vmem:[%s275 + $0x48] sm:$0xff] %v1028
        %1049 = vst [vmem:[%s275 + $0x50] sm:$0xff] %v990
        %1050 = vst [vmem:[%s275 + $0x58] sm:$0xff] %v1031
        %1051 = vst [vmem:[%s275 + $0x60] sm:$0xff] %v993
        %1052 = vst [vmem:[%s275 + $0x68] sm:$0xff] %v1034
        %1053 = vst [vmem:[%s275 + $0x70] sm:$0xff] %v996
        %1054 = vst [vmem:[%s275 + $0x78] sm:$0xff] %v1037
        %s1055 = smul.u32 %s29, 256
        %v1056 = vlaneseq
        %v1057 = vand.u32 %v1056, 127
        %v1058 = vadd.s32 %v1057, 128
        %v1059 = vstv %s1055
        %v1060 = vadd.s32 %v1059, %v1057
        %v1061 = vadd.s32 %v1059, %v1058
        %vm1062 = vcmp.lt.s32.totalorder %v1060, 256
        %vm1063 = vcmp.lt.s32.totalorder %v1061, 256
        %v1064 = vsub.f32 %v975, %v335
        %v1065 = vsub.f32 %v1016, %v336
        %v1066 = vsub.f32 %v978, %v337
        %v1067 = vsub.f32 %v1019, %v338
        %v1068 = vsub.f32 %v981, %v339
        %v1069 = vsub.f32 %v1022, %v340
        %v1070 = vsub.f32 %v984, %v341
        %v1071 = vsub.f32 %v1025, %v342
        %v1072 = vsub.f32 %v987, %v343
        %v1073 = vsub.f32 %v1028, %v344
        %v1074 = vsub.f32 %v990, %v345
        %v1075 = vsub.f32 %v1031, %v346
        %v1076 = vsub.f32 %v993, %v347
        %v1077 = vsub.f32 %v1034, %v348
        %v1078 = vsub.f32 %v996, %v349
        %v1079 = vsub.f32 %v1037, %v350
        %v1080 = vsel %vm1062, 1, 0
        %v1081 = vsel %vm1063, 1, 0
        %vm1082 = vcmp.eq.s32.totalorder %v1080, 1
        %vm1083 = vcmp.eq.s32.totalorder %v1081, 1
        %v1084 = vsel %vm1082, %v1064, 0.0
        %v1085 = vsel %vm1083, %v1065, 0.0
        %v1086 = vsel %vm1082, %v1066, 0.0
        %v1087 = vsel %vm1083, %v1067, 0.0
        %v1088 = vsel %vm1082, %v1068, 0.0
        %v1089 = vsel %vm1083, %v1069, 0.0
        %v1090 = vsel %vm1082, %v1070, 0.0
        %v1091 = vsel %vm1083, %v1071, 0.0
        %v1092 = vsel %vm1082, %v1072, 0.0
        %v1093 = vsel %vm1083, %v1073, 0.0
        %v1094 = vsel %vm1082, %v1074, 0.0
        %v1095 = vsel %vm1083, %v1075, 0.0
        %v1096 = vsel %vm1082, %v1076, 0.0
        %v1097 = vsel %vm1083, %v1077, 0.0
        %v1098 = vsel %vm1082, %v1078, 0.0
        %v1099 = vsel %vm1083, %v1079, 0.0
        %v1100 = vmul.f32 %v1084, %v1084
        %v1101 = vmul.f32 %v1085, %v1085
        %v1102 = vmul.f32 %v1086, %v1086
        %v1103 = vmul.f32 %v1087, %v1087
        %v1104 = vmul.f32 %v1088, %v1088
        %v1105 = vmul.f32 %v1089, %v1089
        %v1106 = vmul.f32 %v1090, %v1090
        %v1107 = vmul.f32 %v1091, %v1091
        %v1108 = vmul.f32 %v1092, %v1092
        %v1109 = vmul.f32 %v1093, %v1093
        %v1110 = vmul.f32 %v1094, %v1094
        %v1111 = vmul.f32 %v1095, %v1095
        %v1112 = vmul.f32 %v1096, %v1096
        %v1113 = vmul.f32 %v1097, %v1097
        %v1114 = vmul.f32 %v1098, %v1098
        %v1115 = vmul.f32 %v1099, %v1099
        %v1116 = vadd.f32 %v1100, %v1102
        %v1117 = vadd.f32 %v1116, %v1104
        %v1118 = vadd.f32 %v1117, %v1106
        %v1119 = vadd.f32 %v1118, %v1108
        %v1120 = vadd.f32 %v1119, %v1110
        %v1121 = vadd.f32 %v1120, %v1112
        %v1122 = vadd.f32 %v1121, %v1114
        %v1123 = vrot.slane %v1122, 4
        %v1124 = vadd.f32 %v1122, %v1123
        %v1125 = vrot.slane %v1124, 2
        %v1126 = vadd.f32 %v1124, %v1125
        %v1127 = vrot.slane %v1126, 1
        %v1128 = vadd.f32 %v1126, %v1127
        %v1129 = vadd.f32 %v1101, %v1103
        %v1130 = vadd.f32 %v1129, %v1105
        %v1131 = vadd.f32 %v1130, %v1107
        %v1132 = vadd.f32 %v1131, %v1109
        %v1133 = vadd.f32 %v1132, %v1111
        %v1134 = vadd.f32 %v1133, %v1113
        %v1135 = vadd.f32 %v1134, %v1115
        %v1136 = vrot.slane %v1135, 4
        %v1137 = vadd.f32 %v1135, %v1136
        %v1138 = vrot.slane %v1137, 2
        %v1139 = vadd.f32 %v1137, %v1138
        %v1140 = vrot.slane %v1139, 1
        %v1141 = vadd.f32 %v1139, %v1140
        %v1142 = vadd.f32 %v1128, %v1141
        %1143 = vadd.xlane.f32.xlu0 %v1142
        %v1144 = vpop.xlane.xlu0 %1143
        %v1145 = vld [vmem:[%s309] sm:$0x1]
        %v1146 = vadd.f32 %v1145, %v1144
        %vm1147 = vcmask 0
        %1148 = vst.msk [vmem:[%s309] sm:$0x1] %vm1147, %v1146
        %v1149 = vld [vmem:[%s314] sm:$0xff]
        %v1150 = vld [vmem:[%s314 + $0x8] sm:$0xff]
        %v1151 = vld [vmem:[%s314 + $0x10] sm:$0xff]
        %v1152 = vld [vmem:[%s314 + $0x18] sm:$0xff]
        %v1153 = vld [vmem:[%s314 + $0x20] sm:$0xff]
        %v1154 = vld [vmem:[%s314 + $0x28] sm:$0xff]
        %v1155 = vld [vmem:[%s314 + $0x30] sm:$0xff]
        %v1156 = vld [vmem:[%s314 + $0x38] sm:$0xff]
        %v1157 = vld [vmem:[%s314 + $0x40] sm:$0xff]
        %v1158 = vld [vmem:[%s314 + $0x48] sm:$0xff]
        %v1159 = vld [vmem:[%s314 + $0x50] sm:$0xff]
        %v1160 = vld [vmem:[%s314 + $0x58] sm:$0xff]
        %v1161 = vld [vmem:[%s314 + $0x60] sm:$0xff]
        %v1162 = vsel %vm1082, %v874, 0.0
        %v1163 = vsel %vm1083, %v875, 0.0
        %v1164 = vsel %vm1082, %v876, 0.0
        %v1165 = vsel %vm1083, %v877, 0.0
        %v1166 = vsel %vm1082, %v878, 0.0
        %v1167 = vsel %vm1083, %v879, 0.0
        %v1168 = vsel %vm1082, %v880, 0.0
        %v1169 = vsel %vm1083, %v881, 0.0
        %v1170 = vsel %vm1082, %v882, 0.0
        %v1171 = vsel %vm1083, %v883, 0.0
        %v1172 = vsel %vm1082, %v884, 0.0
        %v1173 = vsel %vm1083, %v885, 0.0
        %v1174 = vsel %vm1082, %v886, 0.0
        %v1175 = vsel %vm1083, %v887, 0.0
        %v1176 = vsel %vm1082, %v888, 0.0
        %v1177 = vsel %vm1083, %v889, 0.0
        %v1178 = vsel %vm1082, %v890, 0.0
        %v1179 = vsel %vm1083, %v891, 0.0
        %v1180 = vsel %vm1082, %v892, 0.0
        %v1181 = vsel %vm1083, %v893, 0.0
        %v1182 = vsel %vm1082, %v894, 0.0
        %v1183 = vsel %vm1083, %v895, 0.0
        %v1184 = vsel %vm1082, %v896, 0.0
        %v1185 = vsel %vm1083, %v897, 0.0
        %v1186 = vsel %vm1082, %v898, 0.0
        %v1187 = vsel %vm1083, %v899, 0.0
        %v1188 = vadd.f32 %v1162, %v1163
        %1189 = vadd.xlane.f32.xlu0 %v1188
        %v1190 = vpop.xlane.xlu0 %1189
        %v1191 = vadd.f32 %v1164, %v1165
        %1192 = vadd.xlane.f32.xlu0 %v1191
        %v1193 = vpop.xlane.xlu0 %1192
        %v1194 = vadd.f32 %v1166, %v1167
        %1195 = vadd.xlane.f32.xlu0 %v1194
        %v1196 = vpop.xlane.xlu0 %1195
        %v1197 = vadd.f32 %v1168, %v1169
        %1198 = vadd.xlane.f32.xlu0 %v1197
        %v1199 = vpop.xlane.xlu0 %1198
        %v1200 = vadd.f32 %v1170, %v1171
        %1201 = vadd.xlane.f32.xlu0 %v1200
        %v1202 = vpop.xlane.xlu0 %1201
        %v1203 = vadd.f32 %v1172, %v1173
        %1204 = vadd.xlane.f32.xlu0 %v1203
        %v1205 = vpop.xlane.xlu0 %1204
        %v1206 = vadd.f32 %v1174, %v1175
        %1207 = vadd.xlane.f32.xlu0 %v1206
        %v1208 = vpop.xlane.xlu0 %1207
        %v1209 = vadd.f32 %v1176, %v1177
        %1210 = vadd.xlane.f32.xlu0 %v1209
        %v1211 = vpop.xlane.xlu0 %1210
        %v1212 = vadd.f32 %v1178, %v1179
        %1213 = vadd.xlane.f32.xlu0 %v1212
        %v1214 = vpop.xlane.xlu0 %1213
        %v1215 = vadd.f32 %v1180, %v1181
        %1216 = vadd.xlane.f32.xlu0 %v1215
        %v1217 = vpop.xlane.xlu0 %1216
        %v1218 = vadd.f32 %v1182, %v1183
        %1219 = vadd.xlane.f32.xlu0 %v1218
        %v1220 = vpop.xlane.xlu0 %1219
        %v1221 = vadd.f32 %v1184, %v1185
        %1222 = vadd.xlane.f32.xlu0 %v1221
        %v1223 = vpop.xlane.xlu0 %1222
        %v1224 = vadd.f32 %v1186, %v1187
        %1225 = vadd.xlane.f32.xlu0 %v1224
        %v1226 = vpop.xlane.xlu0 %1225
        %v1227 = vadd.f32 %v1149, %v1190
        %v1228 = vadd.f32 %v1150, %v1193
        %v1229 = vadd.f32 %v1151, %v1196
        %v1230 = vadd.f32 %v1152, %v1199
        %v1231 = vadd.f32 %v1153, %v1202
        %v1232 = vadd.f32 %v1154, %v1205
        %v1233 = vadd.f32 %v1155, %v1208
        %v1234 = vadd.f32 %v1156, %v1211
        %v1235 = vadd.f32 %v1157, %v1214
        %v1236 = vadd.f32 %v1158, %v1217
        %v1237 = vadd.f32 %v1159, %v1220
        %v1238 = vadd.f32 %v1160, %v1223
        %v1239 = vadd.f32 %v1161, %v1226
        %vm1240 = vcmask 7168
        %1241 = vst.msk [vmem:[%s314] sm:$0xff] %vm1240, %v1227
        %1242 = vst.msk [vmem:[%s314 + $0x8] sm:$0xff] %vm1240, %v1228
        %1243 = vst.msk [vmem:[%s314 + $0x10] sm:$0xff] %vm1240, %v1229
        %1244 = vst.msk [vmem:[%s314 + $0x18] sm:$0xff] %vm1240, %v1230
        %1245 = vst.msk [vmem:[%s314 + $0x20] sm:$0xff] %vm1240, %v1231
        %1246 = vst.msk [vmem:[%s314 + $0x28] sm:$0xff] %vm1240, %v1232
        %1247 = vst.msk [vmem:[%s314 + $0x30] sm:$0xff] %vm1240, %v1233
        %1248 = vst.msk [vmem:[%s314 + $0x38] sm:$0xff] %vm1240, %v1234
        %1249 = vst.msk [vmem:[%s314 + $0x40] sm:$0xff] %vm1240, %v1235
        %1250 = vst.msk [vmem:[%s314 + $0x48] sm:$0xff] %vm1240, %v1236
        %1251 = vst.msk [vmem:[%s314 + $0x50] sm:$0xff] %vm1240, %v1237
        %1252 = vst.msk [vmem:[%s314 + $0x58] sm:$0xff] %vm1240, %v1238
        %1253 = vst.msk [vmem:[%s314 + $0x60] sm:$0xff] %vm1240, %v1239
        %s1254 = sand.u32 %s116, 1
        %s1255 = scalar_lea.sflag [#allocation3], %s1254
        %s1256 = sand.u32 %s116, 1
        %s1257 = smul.addr %s1256, 128
        %s1258 = scalar_lea.vmem [#allocation2], %s1257
        %s1259 = sand.u32 %s144, 1
        %s1260 = scalar_lea.sflag [#allocation5], %s1259
        %s1261 = sand.u32 %s144, 1
        %s1262 = smul.addr %s1261, 2
        %s1263 = scalar_lea.vmem [#allocation4], %s1262
        %p1264 = scmp.lt.s32.totalorder %s28, 1
        %s1265 = scalar_select %p1264, %s28, 1
        %s1266 = scalar_lea.vmem %s5, %s1265
        %p1267 = scmp.lt.s32.totalorder %s28, 1
        %s1268 = scalar_select %p1267, %s28, 1
        %s1269 = smul.addr %s1268, 13
        %s1270 = smul.addr %s1269, 8
        %s1271 = scalar_lea.vmem %s6, %s1270
        // Predicated region
        $region37: #{tpu_custom_call.1} parent=31 // pred_check
          %p1272 = pneg %p126
        $region38: #{tpu_custom_call.1} parent=31 // pred_check_branch
          %1274 = sbr.rel (%p1272) target = $region40
        $region39: #{tpu_custom_call.1} parent=31 // pred_region
          %s1275 = smul.u32 2, %s29
          %1277 = vsyncadd %s1255, 0
          %s1278 = smul.addr %s28, 16
          %s1279 = sadd.s32 %s1275, %s1278
          %s1280 = smul.addr %s1279, 8
          %s1281 = scalar_lea.hbm %s3, %s1280
          %s1282 = sshll.u32 %s1258, 4
          %s1283 = int_to_ptr.vmem [resolvable:$true] %s1282
          %s1284 = sshll.u32 %s1281, 4
          %s1285 = int_to_ptr.hbm [resolvable:$true] %s1284
          %1290 = dma.vmem_to_hbm [thread:$0]  %s1283, 2048, %s1285, %s1255, 256, 256, 16
        $region40: #{tpu_custom_call.1} parent=31 // pred_fallthru
          _
        // Predicated region
        $region41: #{tpu_custom_call.1} parent=31 // pred_check
          %p1291 = pneg %p154
        $region42: #{tpu_custom_call.1} parent=31 // pred_check_branch
          %1293 = sbr.rel (%p1291) target = $region44
        $region43: #{tpu_custom_call.1} parent=31 // pred_region
          %s1294 = smul.u32 2, %s29
          %1296 = vsyncadd %s1260, 0
          %s1297 = smul.addr %s28, 2
          %s1298 = sadd.s32 %s1294, %s1297
          %s1299 = scalar_lea.hbm %s4, %s1298
          %s1301 = sshll.u32 %s1263, 4
          %s1302 = int_to_ptr.vmem [resolvable:$true] %s1301
          %s1303 = sshll.u32 %s1299, 4
          %s1304 = int_to_ptr.hbm [resolvable:$true] %s1303
          %1306 = dma.vmem_to_hbm [thread:$0]  %s1302, 32, %s1304, %s1260
        $region44: #{tpu_custom_call.1} parent=31 // pred_fallthru
          _
        // Predicated region
        $region45: #{tpu_custom_call.1} parent=31 // pred_check
          %p1307 = pneg %p180
        $region46: #{tpu_custom_call.1} parent=31 // pred_check_branch
          %1309 = sbr.rel (%p1307) target = $region48
        $region47: #{tpu_custom_call.1} parent=31 // pred_region
          _
        $region48: #{tpu_custom_call.1} parent=31 // pred_fallthru
          _
        // Predicated region
        $region49: #{tpu_custom_call.1} parent=31 // pred_check
          %p1310 = pneg %p206
        $region50: #{tpu_custom_call.1} parent=31 // pred_check_branch
          %1312 = sbr.rel (%p1310) target = $region52
        $region51: #{tpu_custom_call.1} parent=31 // pred_region
          _
        $region52: #{tpu_custom_call.1} parent=31 // pred_fallthru
          _
      $region32: #{tpu_custom_call.1} parent=5 // pred_fallthru
        _
      %p1313 = scmp.le.s32.totalorder 2, %s19
      // Predicated region
      $region53: #{tpu_custom_call.1} parent=5 // pred_check
        %p1314 = pneg %p1313
      $region54: #{tpu_custom_call.1} parent=5 // pred_check_branch
        %1316 = sbr.rel (%p1314) target = $region56
      $region55: #{tpu_custom_call.1} parent=5 // pred_region
        %s1317 = ssub.s32 %s19, 2
        // Predicated region
        $region57: #{tpu_custom_call.1} parent=55 // pred_check
          %p1318 = pneg %p132
        $region58: #{tpu_custom_call.1} parent=55 // pred_check_branch
          %1320 = sbr.rel (%p1318) target = $region60
        $region59: #{tpu_custom_call.1} parent=55 // pred_region
          %s1321 = sand.u32 %s117, 1
          %s1322 = scalar_lea.sflag [#allocation3], %s1321
          %s1323 = sand.u32 %s117, 1
          %s1324 = smul.addr %s1323, 128
          %s1325 = scalar_lea.vmem [#allocation2], %s1324
          %1327 = dma.done %s1322, 2048
        $region60: #{tpu_custom_call.1} parent=55 // pred_fallthru
          _
        // Predicated region
        $region61: #{tpu_custom_call.1} parent=55 // pred_check
          %p1328 = pneg %p160
        $region62: #{tpu_custom_call.1} parent=55 // pred_check_branch
          %1330 = sbr.rel (%p1328) target = $region64
        $region63: #{tpu_custom_call.1} parent=55 // pred_region
          %s1331 = sand.u32 %s145, 1
          %s1332 = scalar_lea.sflag [#allocation5], %s1331
          %s1333 = sand.u32 %s145, 1
          %s1334 = smul.addr %s1333, 2
          %s1335 = scalar_lea.vmem [#allocation4], %s1334
          %1337 = dma.done %s1332, 32
        $region64: #{tpu_custom_call.1} parent=55 // pred_fallthru
          _
        // Predicated region
        $region65: #{tpu_custom_call.1} parent=55 // pred_check
          %p1338 = pneg %p186
        $region66: #{tpu_custom_call.1} parent=55 // pred_check_branch
          %1340 = sbr.rel (%p1338) target = $region68
        $region67: #{tpu_custom_call.1} parent=55 // pred_region
          %p1341 = scmp.lt.s32.totalorder %s30, 1
          %s1342 = scalar_select %p1341, %s30, 1
          %s1343 = scalar_lea.vmem %s5, %s1342
        $region68: #{tpu_custom_call.1} parent=55 // pred_fallthru
          _
        // Predicated region
        $region69: #{tpu_custom_call.1} parent=55 // pred_check
          %p1344 = pneg %p212
        $region70: #{tpu_custom_call.1} parent=55 // pred_check_branch
          %1346 = sbr.rel (%p1344) target = $region72
        $region71: #{tpu_custom_call.1} parent=55 // pred_region
          %p1347 = scmp.lt.s32.totalorder %s30, 1
          %s1348 = scalar_select %p1347, %s30, 1
          %s1349 = smul.addr %s1348, 13
          %s1350 = smul.addr %s1349, 8
          %s1351 = scalar_lea.vmem %s6, %s1350
        $region72: #{tpu_custom_call.1} parent=55 // pred_fallthru
          _
      $region56: #{tpu_custom_call.1} parent=5 // pred_fallthru
        _
    $region6: #{tpu_custom_call.1} parent=1 // loop_footer
      %s23 = sadd.s32 1, %s19
    $region7: #{tpu_custom_call.1} parent=1 // loop_footer_branch
      %18 = sbr.rel target = $region3
    $region8: #{tpu_custom_call.1} parent=1 // loop_exit
      _
    %1352 = vsyncpa [#allocation3], 1
    %s1353 = scalar_lea.sflag [#allocation3], 1
    %1354 = vsyncpa %s1353, 1
    %1355 = vsyncpa [#allocation5], 1
    %s1356 = scalar_lea.sflag [#allocation5], 1
    %1357 = vsyncpa %s1356, 1

</llo_original>
